<compile_context>
chip_gen: v7x
topology: tpu7x:2x2x1
jax: 0.10.0
libtpu: 0.0.40
codegen_flags: <defaults>
</compile_context>

<pallas_src>
import jax
import jax.numpy as jnp
from jax.experimental import pallas as pl
from jax.experimental.pallas import tpu as pltpu


# ------------------------------------------------------------------- kernel
def fused_forward_kernel(
    xsh_ref,                                    # (16, 7N, 275) f32 shifted input views
    w1_ref, b1_ref,                             # (9, 1, 275), (1, 275) f32
    k2_ref, b2e_ref, gam_ref, bet_ref,          # (275,84) bf16, (1,84) f32 x3
    fc1w_ref, fc1b_ref, fc2w_ref, fc2b_ref,     # (588,100) bf16, (1,100) f32, (100,10) bf16, (1,10) f32
    out_ref,                                    # (N, 10) f32
):
    N = out_ref.shape[0]

    # ---- conv1 (1->5, 3x3) + ReLU + MaxPool(2,2), emitted directly in the
    # conv2 im2col layout: lhs[i*N + n, d*55 + c*11 + b] = pooled[n, c, i+d, b].
    # The pool over the four phases (p, q) is an elementwise max of four phase
    # accumulators (conv1 output is 22x22 -> even, PyTorch floor pooling exact).
    accs = [None] * 4                           # one accumulator per pool phase
    for di in range(3):
        for dj in range(3):
            w = w1_ref[di * 3 + dj]             # (1, 275): w1[c, di, dj] per lane
            for p in range(2):
                for q in range(2):
                    term = w * xsh_ref[(p + di) * 4 + (q + dj)]
                    idx = p * 2 + q
                    accs[idx] = term if accs[idx] is None else accs[idx] + term
    pooled = jnp.maximum(jnp.maximum(accs[0], accs[1]),
                         jnp.maximum(accs[2], accs[3]))
    lhs = jnp.maximum(pooled + b1_ref[...], 0.0)                       # (7N, 275) f32

    # ---- conv2 (5->12, 5x5) + bias + ReLU: one fused K=275 MXU contraction --
    y2 = jnp.dot(lhs.astype(jnp.bfloat16), k2_ref[...],
                 preferred_element_type=jnp.float32)                   # (7N, 84)
    y2 = jnp.maximum(y2 + b2e_ref[...], 0.0)                           # rows i*N+n, lanes o*7+j

    # ---- GroupNorm(3, 12): per-sample stats over 7 rows x 28-lane groups ----
    rows = [y2[i * N:(i + 1) * N, :] for i in range(7)]                # 7 x (N, 84)
    s1 = rows[0]
    s2 = rows[0] * rows[0]
    for i in range(1, 7):
        s1 = s1 + rows[i]
        s2 = s2 + rows[i] * rows[i]
    gam = gam_ref[...]
    bet = bet_ref[...]
    inv_cnt = 1.0 / (7.0 * 28.0)                                       # 4 ch * 7x7 spatial
    scale_parts, shift_parts = [], []
    for g in range(3):
        sl = slice(g * 28, (g + 1) * 28)
        mu = jnp.sum(s1[:, sl], axis=1, keepdims=True) * inv_cnt       # (N, 1)
        ex2 = jnp.sum(s2[:, sl], axis=1, keepdims=True) * inv_cnt
        rstd = jax.lax.rsqrt(ex2 - mu * mu + 1e-5)                     # biased var, as nn.GroupNorm
        sc = rstd * gam[:, sl]                                         # (N, 28)
        scale_parts.append(sc)
        shift_parts.append(bet[:, sl] - mu * sc)
    scale = jnp.concatenate(scale_parts, axis=1)                       # (N, 84)
    shift = jnp.concatenate(shift_parts, axis=1)                       # (N, 84)

    # ---- flatten (torch order, via fc1w prep) + fc1 + ReLU: one matmul ------
    zcat = jnp.concatenate([r * scale + shift for r in rows], axis=1)  # (N, 588)
    h = jnp.dot(zcat.astype(jnp.bfloat16), fc1w_ref[...],
                preferred_element_type=jnp.float32) + fc1b_ref[...]
    h = jnp.maximum(h, 0.0)                                            # (N, 100)

    # ---- fc2 + LogSoftmax(dim=0, over the batch, as in the reference) -------
    logits = jnp.dot(h.astype(jnp.bfloat16), fc2w_ref[...],
                     preferred_element_type=jnp.float32) + fc2b_ref[...]
    m = jnp.max(logits, axis=0, keepdims=True)
    lse = m + jnp.log(jnp.sum(jnp.exp(logits - m), axis=0, keepdims=True))
    out_ref[...] = logits - lse


# ----------------------------------------------------- one-time param prep
def prepare_params(p):
    """Reshape / retile all weights ONCE (outside the per-forward hot path)."""
    # conv1 weights as per-lane vectors in the (d, c, b) lane layout.
    w1 = p["conv1_w"].reshape(5, 9)                                    # (c, k)
    w1lane = jnp.broadcast_to(w1.T[:, None, :, None],
                              (9, 5, 5, 11)).reshape(9, 1, 275)
    b1lane = jnp.broadcast_to(p["conv1_b"][None, :, None],
                              (5, 5, 11)).reshape(1, 275)

    # conv2 as ONE K=275 matmul: k2[d*55 + c*11 + b, o*7 + j] = w2[o, c, d, b-j]
    w2 = p["conv2_w"]                                                  # (o, c, kh, kw)
    e = jnp.arange(5)[:, None, None]
    b = jnp.arange(11)[None, :, None]
    j = jnp.arange(7)[None, None, :]
    taps = (b == j + e).astype(jnp.float32)                            # (e, b, j)
    k2 = jnp.einsum("ocde,ebj->dcboj", w2, taps).reshape(275, 84)

    b2e = jnp.repeat(p["conv2_b"], 7)[None, :]                         # (1, 84), lane = o*7+j
    gam = jnp.repeat(p["gn_gamma"], 7)[None, :]
    bet = jnp.repeat(p["gn_beta"], 7)[None, :]

    # fc1 rows in (i, o, j) order to match the kernel's lane-concat LHS.
    fc1w = p["fc1_w"].reshape(100, 12, 7, 7).transpose(2, 1, 3, 0).reshape(588, 100)
    fc1b = p["fc1_b"][None, :]                                         # (1, 100)
    fc2w = p["fc2_w"].T                                                # (100, 10)
    fc2b = p["fc2_b"][None, :]                                         # (1, 10)
    return dict(w1=w1lane, b1=b1lane,
                k2=k2.astype(jnp.bfloat16), b2e=b2e, gam=gam, bet=bet,
                fc1w=fc1w.astype(jnp.bfloat16), fc1b=fc1b,
                fc2w=fc2w.astype(jnp.bfloat16), fc2b=fc2b)


# ------------------------------------------------------------ forward pass
def classification_model_forward(x, prepped):
    N = x.shape[0]
    assert x.shape[1:] == (1, 24, 24), "kernel is specialized to 1x24x24 input"

    # Layout plumbing only (no arithmetic): 16 shifted + 2-strided +
    # channel-tiled views of the input so conv1+pool is evaluated directly in
    # the conv2 im2col layout inside the kernel:
    #   xsh[s*4 + t, i*N + n, d*55 + c*11 + b] = x[n, 0, 2*(i+d) + s, 2*b + t]
    x2 = x[:, 0]                                                       # (N, 24, 24)
    s = jnp.arange(4)[:, None, None, None, None]
    t = jnp.arange(4)[None, :, None, None, None]
    i = jnp.arange(7)[None, None, :, None, None]
    d = jnp.arange(5)[None, None, None, :, None]
    b = jnp.arange(11)[None, None, None, None, :]
    xg = x2[:, 2 * (i + d) + s, 2 * b + t]                             # (N, 4, 4, 7, 5, 11)
    xg = jnp.transpose(xg, (1, 2, 3, 0, 4, 5))                         # (4, 4, 7, N, 5, 11)
    xsh = jnp.broadcast_to(xg[:, :, :, :, :, None, :],
                           (4, 4, 7, N, 5, 5, 11)).reshape(16, 7 * N, 275)

    vmem = pl.BlockSpec(memory_space=pltpu.MemorySpace.VMEM)
    return pl.pallas_call(
        fused_forward_kernel,
        out_shape=jax.ShapeDtypeStruct((N, 10), jnp.float32),
        in_specs=[vmem] * 11,
        out_specs=vmem,
    )(xsh, prepped["w1"], prepped["b1"], prepped["k2"], prepped["b2e"],
      prepped["gam"], prepped["bet"], prepped["fc1w"], prepped["fc1b"],
      prepped["fc2w"], prepped["fc2b"])
    # TODO(synk): training-mode branch (NLLLoss over labels) not implemented;
    # this reproduces the eval-mode forward which returns log-probabilities.


# -------------------------------------------------------------- parameters
def init_params(key, fc1_in):
    ks = jax.random.split(key, 8)

    def u(k, shape, fan_in):
        bound = 1.0 / jnp.sqrt(jnp.float32(fan_in))
        return jax.random.uniform(k, shape, jnp.float32, -bound, bound)

    return {
        "conv1_w": u(ks[0], (5, 1, 3, 3), 1 * 3 * 3),
        "conv1_b": u(ks[1], (5,), 1 * 3 * 3),
        "conv2_w": u(ks[2], (12, 5, 5, 5), 5 * 5 * 5),
        "conv2_b": u(ks[3], (12,), 5 * 5 * 5),
        "gn_gamma": jnp.ones((12,), jnp.float32),     # nn.GroupNorm default affine
        "gn_beta": jnp.zeros((12,), jnp.float32),
        "fc1_w": u(ks[4], (100, fc1_in), fc1_in),
        "fc1_b": u(ks[5], (100,), fc1_in),
        "fc2_w": u(ks[6], (10, 100), 100),
        "fc2_b": u(ks[7], (10,), 100),
    }


if __name__ == "__main__":
    # (2,1,24,24) -> conv1 -> (2,5,22,22) -> pool -> (2,5,11,11)
    # -> conv2 -> (2,12,7,7) -> GroupNorm -> flatten -> (2,588)
    # -> fc1 -> (2,100) -> fc2 + LogSoftmax(dim=0) -> (2,10)
    key = jax.random.PRNGKey(0)
    kx, kp = jax.random.split(key)
    x = jax.random.normal(kx, (2, 1, 24, 24), jnp.float32)
    params = init_params(kp, fc1_in=12 * 7 * 7)
    prepped = prepare_params(params)              # one-time weight prep

    fwd = jax.jit(classification_model_forward)
    out = jax.block_until_ready(fwd(x, prepped))
    assert out.shape == (2, 10) and out.dtype == jnp.float32
    assert bool(jnp.all(jnp.isfinite(out)))
    print("KERNEL_OK")
</pallas_src>

<mosaic_0001>
module attributes {stable_mosaic.version = 11 : i64} {
  func.func @fused_forward_kernel(%arg0: memref<16x14x275xf32, #tpu.memory_space<vmem>>, %arg1: memref<9x1x275xf32, #tpu.memory_space<vmem>>, %arg2: memref<1x275xf32, #tpu.memory_space<vmem>>, %arg3: memref<275x84xbf16, #tpu.memory_space<vmem>>, %arg4: memref<1x84xf32, #tpu.memory_space<vmem>>, %arg5: memref<1x84xf32, #tpu.memory_space<vmem>>, %arg6: memref<1x84xf32, #tpu.memory_space<vmem>>, %arg7: memref<588x100xbf16, #tpu.memory_space<vmem>>, %arg8: memref<1x100xf32, #tpu.memory_space<vmem>>, %arg9: memref<100x10xbf16, #tpu.memory_space<vmem>>, %arg10: memref<1x10xf32, #tpu.memory_space<vmem>>, %arg11: memref<2x10xf32, #tpu.memory_space<vmem>>) attributes {dimension_semantics = [], scalar_prefetch = 0 : i64, scratch_operands = 0 : i64, tpu.core_type = #tpu.core_type<tc>} {
    %c0 = arith.constant 0 : index
    %c0_0 = arith.constant 0 : index
    %c0_1 = arith.constant 0 : index
    %0 = vector.load %arg1[%c0, %c0_0, %c0_1] : memref<9x1x275xf32, #tpu.memory_space<vmem>>, vector<1x1x275xf32>
    %1 = vector.shape_cast %0 : vector<1x1x275xf32> to vector<1x275xf32>
    %c0_2 = arith.constant 0 : index
    %c0_3 = arith.constant 0 : index
    %c0_4 = arith.constant 0 : index
    %2 = vector.load %arg0[%c0_2, %c0_3, %c0_4] : memref<16x14x275xf32, #tpu.memory_space<vmem>>, vector<1x14x275xf32>
    %3 = vector.shape_cast %2 : vector<1x14x275xf32> to vector<14x275xf32>
    %4 = vector.broadcast %1 : vector<1x275xf32> to vector<14x275xf32>
    %5 = arith.mulf %4, %3 : vector<14x275xf32>
    %c1 = arith.constant 1 : index
    %c0_5 = arith.constant 0 : index
    %c0_6 = arith.constant 0 : index
    %6 = vector.load %arg0[%c1, %c0_5, %c0_6] : memref<16x14x275xf32, #tpu.memory_space<vmem>>, vector<1x14x275xf32>
    %7 = vector.shape_cast %6 : vector<1x14x275xf32> to vector<14x275xf32>
    %8 = vector.broadcast %1 : vector<1x275xf32> to vector<14x275xf32>
    %9 = arith.mulf %8, %7 : vector<14x275xf32>
    %c4 = arith.constant 4 : index
    %c0_7 = arith.constant 0 : index
    %c0_8 = arith.constant 0 : index
    %10 = vector.load %arg0[%c4, %c0_7, %c0_8] : memref<16x14x275xf32, #tpu.memory_space<vmem>>, vector<1x14x275xf32>
    %11 = vector.shape_cast %10 : vector<1x14x275xf32> to vector<14x275xf32>
    %12 = vector.broadcast %1 : vector<1x275xf32> to vector<14x275xf32>
    %13 = arith.mulf %12, %11 : vector<14x275xf32>
    %c5 = arith.constant 5 : index
    %c0_9 = arith.constant 0 : index
    %c0_10 = arith.constant 0 : index
    %14 = vector.load %arg0[%c5, %c0_9, %c0_10] : memref<16x14x275xf32, #tpu.memory_space<vmem>>, vector<1x14x275xf32>
    %15 = vector.shape_cast %14 : vector<1x14x275xf32> to vector<14x275xf32>
    %16 = vector.broadcast %1 : vector<1x275xf32> to vector<14x275xf32>
    %17 = arith.mulf %16, %15 : vector<14x275xf32>
    %c1_11 = arith.constant 1 : index
    %c0_12 = arith.constant 0 : index
    %c0_13 = arith.constant 0 : index
    %18 = vector.load %arg1[%c1_11, %c0_12, %c0_13] : memref<9x1x275xf32, #tpu.memory_space<vmem>>, vector<1x1x275xf32>
    %19 = vector.shape_cast %18 : vector<1x1x275xf32> to vector<1x275xf32>
    %c1_14 = arith.constant 1 : index
    %c0_15 = arith.constant 0 : index
    %c0_16 = arith.constant 0 : index
    %20 = vector.load %arg0[%c1_14, %c0_15, %c0_16] : memref<16x14x275xf32, #tpu.memory_space<vmem>>, vector<1x14x275xf32>
    %21 = vector.shape_cast %20 : vector<1x14x275xf32> to vector<14x275xf32>
    %22 = vector.broadcast %19 : vector<1x275xf32> to vector<14x275xf32>
    %23 = arith.mulf %22, %21 : vector<14x275xf32>
    %24 = arith.addf %5, %23 : vector<14x275xf32>
    %c2 = arith.constant 2 : index
    %c0_17 = arith.constant 0 : index
    %c0_18 = arith.constant 0 : index
    %25 = vector.load %arg0[%c2, %c0_17, %c0_18] : memref<16x14x275xf32, #tpu.memory_space<vmem>>, vector<1x14x275xf32>
    %26 = vector.shape_cast %25 : vector<1x14x275xf32> to vector<14x275xf32>
    %27 = vector.broadcast %19 : vector<1x275xf32> to vector<14x275xf32>
    %28 = arith.mulf %27, %26 : vector<14x275xf32>
    %29 = arith.addf %9, %28 : vector<14x275xf32>
    %c5_19 = arith.constant 5 : index
    %c0_20 = arith.constant 0 : index
    %c0_21 = arith.constant 0 : index
    %30 = vector.load %arg0[%c5_19, %c0_20, %c0_21] : memref<16x14x275xf32, #tpu.memory_space<vmem>>, vector<1x14x275xf32>
    %31 = vector.shape_cast %30 : vector<1x14x275xf32> to vector<14x275xf32>
    %32 = vector.broadcast %19 : vector<1x275xf32> to vector<14x275xf32>
    %33 = arith.mulf %32, %31 : vector<14x275xf32>
    %34 = arith.addf %13, %33 : vector<14x275xf32>
    %c6 = arith.constant 6 : index
    %c0_22 = arith.constant 0 : index
    %c0_23 = arith.constant 0 : index
    %35 = vector.load %arg0[%c6, %c0_22, %c0_23] : memref<16x14x275xf32, #tpu.memory_space<vmem>>, vector<1x14x275xf32>
    %36 = vector.shape_cast %35 : vector<1x14x275xf32> to vector<14x275xf32>
    %37 = vector.broadcast %19 : vector<1x275xf32> to vector<14x275xf32>
    %38 = arith.mulf %37, %36 : vector<14x275xf32>
    %39 = arith.addf %17, %38 : vector<14x275xf32>
    %c2_24 = arith.constant 2 : index
    %c0_25 = arith.constant 0 : index
    %c0_26 = arith.constant 0 : index
    %40 = vector.load %arg1[%c2_24, %c0_25, %c0_26] : memref<9x1x275xf32, #tpu.memory_space<vmem>>, vector<1x1x275xf32>
    %41 = vector.shape_cast %40 : vector<1x1x275xf32> to vector<1x275xf32>
    %c2_27 = arith.constant 2 : index
    %c0_28 = arith.constant 0 : index
    %c0_29 = arith.constant 0 : index
    %42 = vector.load %arg0[%c2_27, %c0_28, %c0_29] : memref<16x14x275xf32, #tpu.memory_space<vmem>>, vector<1x14x275xf32>
    %43 = vector.shape_cast %42 : vector<1x14x275xf32> to vector<14x275xf32>
    %44 = vector.broadcast %41 : vector<1x275xf32> to vector<14x275xf32>
    %45 = arith.mulf %44, %43 : vector<14x275xf32>
    %46 = arith.addf %24, %45 : vector<14x275xf32>
    %c3 = arith.constant 3 : index
    %c0_30 = arith.constant 0 : index
    %c0_31 = arith.constant 0 : index
    %47 = vector.load %arg0[%c3, %c0_30, %c0_31] : memref<16x14x275xf32, #tpu.memory_space<vmem>>, vector<1x14x275xf32>
    %48 = vector.shape_cast %47 : vector<1x14x275xf32> to vector<14x275xf32>
    %49 = vector.broadcast %41 : vector<1x275xf32> to vector<14x275xf32>
    %50 = arith.mulf %49, %48 : vector<14x275xf32>
    %51 = arith.addf %29, %50 : vector<14x275xf32>
    %c6_32 = arith.constant 6 : index
    %c0_33 = arith.constant 0 : index
    %c0_34 = arith.constant 0 : index
    %52 = vector.load %arg0[%c6_32, %c0_33, %c0_34] : memref<16x14x275xf32, #tpu.memory_space<vmem>>, vector<1x14x275xf32>
    %53 = vector.shape_cast %52 : vector<1x14x275xf32> to vector<14x275xf32>
    %54 = vector.broadcast %41 : vector<1x275xf32> to vector<14x275xf32>
    %55 = arith.mulf %54, %53 : vector<14x275xf32>
    %56 = arith.addf %34, %55 : vector<14x275xf32>
    %c7 = arith.constant 7 : index
    %c0_35 = arith.constant 0 : index
    %c0_36 = arith.constant 0 : index
    %57 = vector.load %arg0[%c7, %c0_35, %c0_36] : memref<16x14x275xf32, #tpu.memory_space<vmem>>, vector<1x14x275xf32>
    %58 = vector.shape_cast %57 : vector<1x14x275xf32> to vector<14x275xf32>
    %59 = vector.broadcast %41 : vector<1x275xf32> to vector<14x275xf32>
    %60 = arith.mulf %59, %58 : vector<14x275xf32>
    %61 = arith.addf %39, %60 : vector<14x275xf32>
    %c3_37 = arith.constant 3 : index
    %c0_38 = arith.constant 0 : index
    %c0_39 = arith.constant 0 : index
    %62 = vector.load %arg1[%c3_37, %c0_38, %c0_39] : memref<9x1x275xf32, #tpu.memory_space<vmem>>, vector<1x1x275xf32>
    %63 = vector.shape_cast %62 : vector<1x1x275xf32> to vector<1x275xf32>
    %c4_40 = arith.constant 4 : index
    %c0_41 = arith.constant 0 : index
    %c0_42 = arith.constant 0 : index
    %64 = vector.load %arg0[%c4_40, %c0_41, %c0_42] : memref<16x14x275xf32, #tpu.memory_space<vmem>>, vector<1x14x275xf32>
    %65 = vector.shape_cast %64 : vector<1x14x275xf32> to vector<14x275xf32>
    %66 = vector.broadcast %63 : vector<1x275xf32> to vector<14x275xf32>
    %67 = arith.mulf %66, %65 : vector<14x275xf32>
    %68 = arith.addf %46, %67 : vector<14x275xf32>
    %c5_43 = arith.constant 5 : index
    %c0_44 = arith.constant 0 : index
    %c0_45 = arith.constant 0 : index
    %69 = vector.load %arg0[%c5_43, %c0_44, %c0_45] : memref<16x14x275xf32, #tpu.memory_space<vmem>>, vector<1x14x275xf32>
    %70 = vector.shape_cast %69 : vector<1x14x275xf32> to vector<14x275xf32>
    %71 = vector.broadcast %63 : vector<1x275xf32> to vector<14x275xf32>
    %72 = arith.mulf %71, %70 : vector<14x275xf32>
    %73 = arith.addf %51, %72 : vector<14x275xf32>
    %c8 = arith.constant 8 : index
    %c0_46 = arith.constant 0 : index
    %c0_47 = arith.constant 0 : index
    %74 = vector.load %arg0[%c8, %c0_46, %c0_47] : memref<16x14x275xf32, #tpu.memory_space<vmem>>, vector<1x14x275xf32>
    %75 = vector.shape_cast %74 : vector<1x14x275xf32> to vector<14x275xf32>
    %76 = vector.broadcast %63 : vector<1x275xf32> to vector<14x275xf32>
    %77 = arith.mulf %76, %75 : vector<14x275xf32>
    %78 = arith.addf %56, %77 : vector<14x275xf32>
    %c9 = arith.constant 9 : index
    %c0_48 = arith.constant 0 : index
    %c0_49 = arith.constant 0 : index
    %79 = vector.load %arg0[%c9, %c0_48, %c0_49] : memref<16x14x275xf32, #tpu.memory_space<vmem>>, vector<1x14x275xf32>
    %80 = vector.shape_cast %79 : vector<1x14x275xf32> to vector<14x275xf32>
    %81 = vector.broadcast %63 : vector<1x275xf32> to vector<14x275xf32>
    %82 = arith.mulf %81, %80 : vector<14x275xf32>
    %83 = arith.addf %61, %82 : vector<14x275xf32>
    %c4_50 = arith.constant 4 : index
    %c0_51 = arith.constant 0 : index
    %c0_52 = arith.constant 0 : index
    %84 = vector.load %arg1[%c4_50, %c0_51, %c0_52] : memref<9x1x275xf32, #tpu.memory_space<vmem>>, vector<1x1x275xf32>
    %85 = vector.shape_cast %84 : vector<1x1x275xf32> to vector<1x275xf32>
    %c5_53 = arith.constant 5 : index
    %c0_54 = arith.constant 0 : index
    %c0_55 = arith.constant 0 : index
    %86 = vector.load %arg0[%c5_53, %c0_54, %c0_55] : memref<16x14x275xf32, #tpu.memory_space<vmem>>, vector<1x14x275xf32>
    %87 = vector.shape_cast %86 : vector<1x14x275xf32> to vector<14x275xf32>
    %88 = vector.broadcast %85 : vector<1x275xf32> to vector<14x275xf32>
    %89 = arith.mulf %88, %87 : vector<14x275xf32>
    %90 = arith.addf %68, %89 : vector<14x275xf32>
    %c6_56 = arith.constant 6 : index
    %c0_57 = arith.constant 0 : index
    %c0_58 = arith.constant 0 : index
    %91 = vector.load %arg0[%c6_56, %c0_57, %c0_58] : memref<16x14x275xf32, #tpu.memory_space<vmem>>, vector<1x14x275xf32>
    %92 = vector.shape_cast %91 : vector<1x14x275xf32> to vector<14x275xf32>
    %93 = vector.broadcast %85 : vector<1x275xf32> to vector<14x275xf32>
    %94 = arith.mulf %93, %92 : vector<14x275xf32>
    %95 = arith.addf %73, %94 : vector<14x275xf32>
    %c9_59 = arith.constant 9 : index
    %c0_60 = arith.constant 0 : index
    %c0_61 = arith.constant 0 : index
    %96 = vector.load %arg0[%c9_59, %c0_60, %c0_61] : memref<16x14x275xf32, #tpu.memory_space<vmem>>, vector<1x14x275xf32>
    %97 = vector.shape_cast %96 : vector<1x14x275xf32> to vector<14x275xf32>
    %98 = vector.broadcast %85 : vector<1x275xf32> to vector<14x275xf32>
    %99 = arith.mulf %98, %97 : vector<14x275xf32>
    %100 = arith.addf %78, %99 : vector<14x275xf32>
    %c10 = arith.constant 10 : index
    %c0_62 = arith.constant 0 : index
    %c0_63 = arith.constant 0 : index
    %101 = vector.load %arg0[%c10, %c0_62, %c0_63] : memref<16x14x275xf32, #tpu.memory_space<vmem>>, vector<1x14x275xf32>
    %102 = vector.shape_cast %101 : vector<1x14x275xf32> to vector<14x275xf32>
    %103 = vector.broadcast %85 : vector<1x275xf32> to vector<14x275xf32>
    %104 = arith.mulf %103, %102 : vector<14x275xf32>
    %105 = arith.addf %83, %104 : vector<14x275xf32>
    %c5_64 = arith.constant 5 : index
    %c0_65 = arith.constant 0 : index
    %c0_66 = arith.constant 0 : index
    %106 = vector.load %arg1[%c5_64, %c0_65, %c0_66] : memref<9x1x275xf32, #tpu.memory_space<vmem>>, vector<1x1x275xf32>
    %107 = vector.shape_cast %106 : vector<1x1x275xf32> to vector<1x275xf32>
    %c6_67 = arith.constant 6 : index
    %c0_68 = arith.constant 0 : index
    %c0_69 = arith.constant 0 : index
    %108 = vector.load %arg0[%c6_67, %c0_68, %c0_69] : memref<16x14x275xf32, #tpu.memory_space<vmem>>, vector<1x14x275xf32>
    %109 = vector.shape_cast %108 : vector<1x14x275xf32> to vector<14x275xf32>
    %110 = vector.broadcast %107 : vector<1x275xf32> to vector<14x275xf32>
    %111 = arith.mulf %110, %109 : vector<14x275xf32>
    %112 = arith.addf %90, %111 : vector<14x275xf32>
    %c7_70 = arith.constant 7 : index
    %c0_71 = arith.constant 0 : index
    %c0_72 = arith.constant 0 : index
    %113 = vector.load %arg0[%c7_70, %c0_71, %c0_72] : memref<16x14x275xf32, #tpu.memory_space<vmem>>, vector<1x14x275xf32>
    %114 = vector.shape_cast %113 : vector<1x14x275xf32> to vector<14x275xf32>
    %115 = vector.broadcast %107 : vector<1x275xf32> to vector<14x275xf32>
    %116 = arith.mulf %115, %114 : vector<14x275xf32>
    %117 = arith.addf %95, %116 : vector<14x275xf32>
    %c10_73 = arith.constant 10 : index
    %c0_74 = arith.constant 0 : index
    %c0_75 = arith.constant 0 : index
    %118 = vector.load %arg0[%c10_73, %c0_74, %c0_75] : memref<16x14x275xf32, #tpu.memory_space<vmem>>, vector<1x14x275xf32>
    %119 = vector.shape_cast %118 : vector<1x14x275xf32> to vector<14x275xf32>
    %120 = vector.broadcast %107 : vector<1x275xf32> to vector<14x275xf32>
    %121 = arith.mulf %120, %119 : vector<14x275xf32>
    %122 = arith.addf %100, %121 : vector<14x275xf32>
    %c11 = arith.constant 11 : index
    %c0_76 = arith.constant 0 : index
    %c0_77 = arith.constant 0 : index
    %123 = vector.load %arg0[%c11, %c0_76, %c0_77] : memref<16x14x275xf32, #tpu.memory_space<vmem>>, vector<1x14x275xf32>
    %124 = vector.shape_cast %123 : vector<1x14x275xf32> to vector<14x275xf32>
    %125 = vector.broadcast %107 : vector<1x275xf32> to vector<14x275xf32>
    %126 = arith.mulf %125, %124 : vector<14x275xf32>
    %127 = arith.addf %105, %126 : vector<14x275xf32>
    %c6_78 = arith.constant 6 : index
    %c0_79 = arith.constant 0 : index
    %c0_80 = arith.constant 0 : index
    %128 = vector.load %arg1[%c6_78, %c0_79, %c0_80] : memref<9x1x275xf32, #tpu.memory_space<vmem>>, vector<1x1x275xf32>
    %129 = vector.shape_cast %128 : vector<1x1x275xf32> to vector<1x275xf32>
    %c8_81 = arith.constant 8 : index
    %c0_82 = arith.constant 0 : index
    %c0_83 = arith.constant 0 : index
    %130 = vector.load %arg0[%c8_81, %c0_82, %c0_83] : memref<16x14x275xf32, #tpu.memory_space<vmem>>, vector<1x14x275xf32>
    %131 = vector.shape_cast %130 : vector<1x14x275xf32> to vector<14x275xf32>
    %132 = vector.broadcast %129 : vector<1x275xf32> to vector<14x275xf32>
    %133 = arith.mulf %132, %131 : vector<14x275xf32>
    %134 = arith.addf %112, %133 : vector<14x275xf32>
    %c9_84 = arith.constant 9 : index
    %c0_85 = arith.constant 0 : index
    %c0_86 = arith.constant 0 : index
    %135 = vector.load %arg0[%c9_84, %c0_85, %c0_86] : memref<16x14x275xf32, #tpu.memory_space<vmem>>, vector<1x14x275xf32>
    %136 = vector.shape_cast %135 : vector<1x14x275xf32> to vector<14x275xf32>
    %137 = vector.broadcast %129 : vector<1x275xf32> to vector<14x275xf32>
    %138 = arith.mulf %137, %136 : vector<14x275xf32>
    %139 = arith.addf %117, %138 : vector<14x275xf32>
    %c12 = arith.constant 12 : index
    %c0_87 = arith.constant 0 : index
    %c0_88 = arith.constant 0 : index
    %140 = vector.load %arg0[%c12, %c0_87, %c0_88] : memref<16x14x275xf32, #tpu.memory_space<vmem>>, vector<1x14x275xf32>
    %141 = vector.shape_cast %140 : vector<1x14x275xf32> to vector<14x275xf32>
    %142 = vector.broadcast %129 : vector<1x275xf32> to vector<14x275xf32>
    %143 = arith.mulf %142, %141 : vector<14x275xf32>
    %144 = arith.addf %122, %143 : vector<14x275xf32>
    %c13 = arith.constant 13 : index
    %c0_89 = arith.constant 0 : index
    %c0_90 = arith.constant 0 : index
    %145 = vector.load %arg0[%c13, %c0_89, %c0_90] : memref<16x14x275xf32, #tpu.memory_space<vmem>>, vector<1x14x275xf32>
    %146 = vector.shape_cast %145 : vector<1x14x275xf32> to vector<14x275xf32>
    %147 = vector.broadcast %129 : vector<1x275xf32> to vector<14x275xf32>
    %148 = arith.mulf %147, %146 : vector<14x275xf32>
    %149 = arith.addf %127, %148 : vector<14x275xf32>
    %c7_91 = arith.constant 7 : index
    %c0_92 = arith.constant 0 : index
    %c0_93 = arith.constant 0 : index
    %150 = vector.load %arg1[%c7_91, %c0_92, %c0_93] : memref<9x1x275xf32, #tpu.memory_space<vmem>>, vector<1x1x275xf32>
    %151 = vector.shape_cast %150 : vector<1x1x275xf32> to vector<1x275xf32>
    %c9_94 = arith.constant 9 : index
    %c0_95 = arith.constant 0 : index
    %c0_96 = arith.constant 0 : index
    %152 = vector.load %arg0[%c9_94, %c0_95, %c0_96] : memref<16x14x275xf32, #tpu.memory_space<vmem>>, vector<1x14x275xf32>
    %153 = vector.shape_cast %152 : vector<1x14x275xf32> to vector<14x275xf32>
    %154 = vector.broadcast %151 : vector<1x275xf32> to vector<14x275xf32>
    %155 = arith.mulf %154, %153 : vector<14x275xf32>
    %156 = arith.addf %134, %155 : vector<14x275xf32>
    %c10_97 = arith.constant 10 : index
    %c0_98 = arith.constant 0 : index
    %c0_99 = arith.constant 0 : index
    %157 = vector.load %arg0[%c10_97, %c0_98, %c0_99] : memref<16x14x275xf32, #tpu.memory_space<vmem>>, vector<1x14x275xf32>
    %158 = vector.shape_cast %157 : vector<1x14x275xf32> to vector<14x275xf32>
    %159 = vector.broadcast %151 : vector<1x275xf32> to vector<14x275xf32>
    %160 = arith.mulf %159, %158 : vector<14x275xf32>
    %161 = arith.addf %139, %160 : vector<14x275xf32>
    %c13_100 = arith.constant 13 : index
    %c0_101 = arith.constant 0 : index
    %c0_102 = arith.constant 0 : index
    %162 = vector.load %arg0[%c13_100, %c0_101, %c0_102] : memref<16x14x275xf32, #tpu.memory_space<vmem>>, vector<1x14x275xf32>
    %163 = vector.shape_cast %162 : vector<1x14x275xf32> to vector<14x275xf32>
    %164 = vector.broadcast %151 : vector<1x275xf32> to vector<14x275xf32>
    %165 = arith.mulf %164, %163 : vector<14x275xf32>
    %166 = arith.addf %144, %165 : vector<14x275xf32>
    %c14 = arith.constant 14 : index
    %c0_103 = arith.constant 0 : index
    %c0_104 = arith.constant 0 : index
    %167 = vector.load %arg0[%c14, %c0_103, %c0_104] : memref<16x14x275xf32, #tpu.memory_space<vmem>>, vector<1x14x275xf32>
    %168 = vector.shape_cast %167 : vector<1x14x275xf32> to vector<14x275xf32>
    %169 = vector.broadcast %151 : vector<1x275xf32> to vector<14x275xf32>
    %170 = arith.mulf %169, %168 : vector<14x275xf32>
    %171 = arith.addf %149, %170 : vector<14x275xf32>
    %c8_105 = arith.constant 8 : index
    %c0_106 = arith.constant 0 : index
    %c0_107 = arith.constant 0 : index
    %172 = vector.load %arg1[%c8_105, %c0_106, %c0_107] : memref<9x1x275xf32, #tpu.memory_space<vmem>>, vector<1x1x275xf32>
    %173 = vector.shape_cast %172 : vector<1x1x275xf32> to vector<1x275xf32>
    %c10_108 = arith.constant 10 : index
    %c0_109 = arith.constant 0 : index
    %c0_110 = arith.constant 0 : index
    %174 = vector.load %arg0[%c10_108, %c0_109, %c0_110] : memref<16x14x275xf32, #tpu.memory_space<vmem>>, vector<1x14x275xf32>
    %175 = vector.shape_cast %174 : vector<1x14x275xf32> to vector<14x275xf32>
    %176 = vector.broadcast %173 : vector<1x275xf32> to vector<14x275xf32>
    %177 = arith.mulf %176, %175 : vector<14x275xf32>
    %178 = arith.addf %156, %177 : vector<14x275xf32>
    %c11_111 = arith.constant 11 : index
    %c0_112 = arith.constant 0 : index
    %c0_113 = arith.constant 0 : index
    %179 = vector.load %arg0[%c11_111, %c0_112, %c0_113] : memref<16x14x275xf32, #tpu.memory_space<vmem>>, vector<1x14x275xf32>
    %180 = vector.shape_cast %179 : vector<1x14x275xf32> to vector<14x275xf32>
    %181 = vector.broadcast %173 : vector<1x275xf32> to vector<14x275xf32>
    %182 = arith.mulf %181, %180 : vector<14x275xf32>
    %183 = arith.addf %161, %182 : vector<14x275xf32>
    %c14_114 = arith.constant 14 : index
    %c0_115 = arith.constant 0 : index
    %c0_116 = arith.constant 0 : index
    %184 = vector.load %arg0[%c14_114, %c0_115, %c0_116] : memref<16x14x275xf32, #tpu.memory_space<vmem>>, vector<1x14x275xf32>
    %185 = vector.shape_cast %184 : vector<1x14x275xf32> to vector<14x275xf32>
    %186 = vector.broadcast %173 : vector<1x275xf32> to vector<14x275xf32>
    %187 = arith.mulf %186, %185 : vector<14x275xf32>
    %188 = arith.addf %166, %187 : vector<14x275xf32>
    %c15 = arith.constant 15 : index
    %c0_117 = arith.constant 0 : index
    %c0_118 = arith.constant 0 : index
    %189 = vector.load %arg0[%c15, %c0_117, %c0_118] : memref<16x14x275xf32, #tpu.memory_space<vmem>>, vector<1x14x275xf32>
    %190 = vector.shape_cast %189 : vector<1x14x275xf32> to vector<14x275xf32>
    %191 = vector.broadcast %173 : vector<1x275xf32> to vector<14x275xf32>
    %192 = arith.mulf %191, %190 : vector<14x275xf32>
    %193 = arith.addf %171, %192 : vector<14x275xf32>
    %194 = arith.maximumf %178, %183 : vector<14x275xf32>
    %195 = arith.maximumf %188, %193 : vector<14x275xf32>
    %196 = arith.maximumf %194, %195 : vector<14x275xf32>
    %c0_119 = arith.constant 0 : index
    %c0_120 = arith.constant 0 : index
    %197 = vector.load %arg2[%c0_119, %c0_120] : memref<1x275xf32, #tpu.memory_space<vmem>>, vector<1x275xf32>
    %198 = vector.broadcast %197 : vector<1x275xf32> to vector<14x275xf32>
    %199 = arith.addf %196, %198 : vector<14x275xf32>
    %cst = arith.constant 0.000000e+00 : f32
    %200 = vector.broadcast %cst : f32 to vector<14x275xf32>
    %201 = arith.maximumf %199, %200 : vector<14x275xf32>
    %202 = arith.truncf %201 : vector<14x275xf32> to vector<14x275xbf16>
    %c0_121 = arith.constant 0 : index
    %c0_122 = arith.constant 0 : index
    %203 = vector.load %arg3[%c0_121, %c0_122] : memref<275x84xbf16, #tpu.memory_space<vmem>>, vector<275x84xbf16>
    %cst_123 = arith.constant dense<0.000000e+00> : vector<14x84xf32>
    %204 = tpu.matmul %202, %203, %cst_123 {dimension_numbers = #tpu.dot_dimension_numbers<[1], [0], [0], [1], [0, 0, 1, 1], [], []>} : vector<14x275xbf16>, vector<275x84xbf16>, vector<14x84xf32> -> vector<14x84xf32>
    %c0_124 = arith.constant 0 : index
    %c0_125 = arith.constant 0 : index
    %205 = vector.load %arg4[%c0_124, %c0_125] : memref<1x84xf32, #tpu.memory_space<vmem>>, vector<1x84xf32>
    %206 = vector.broadcast %205 : vector<1x84xf32> to vector<14x84xf32>
    %207 = arith.addf %204, %206 : vector<14x84xf32>
    %cst_126 = arith.constant 0.000000e+00 : f32
    %208 = vector.broadcast %cst_126 : f32 to vector<14x84xf32>
    %209 = arith.maximumf %207, %208 : vector<14x84xf32>
    %210 = vector.extract_strided_slice %209 {offsets = [0, 0], sizes = [2, 84], strides = [1, 1]} : vector<14x84xf32> to vector<2x84xf32>
    %211 = vector.extract_strided_slice %209 {offsets = [2, 0], sizes = [2, 84], strides = [1, 1]} : vector<14x84xf32> to vector<2x84xf32>
    %212 = vector.extract_strided_slice %209 {offsets = [4, 0], sizes = [2, 84], strides = [1, 1]} : vector<14x84xf32> to vector<2x84xf32>
    %213 = vector.extract_strided_slice %209 {offsets = [6, 0], sizes = [2, 84], strides = [1, 1]} : vector<14x84xf32> to vector<2x84xf32>
    %214 = vector.extract_strided_slice %209 {offsets = [8, 0], sizes = [2, 84], strides = [1, 1]} : vector<14x84xf32> to vector<2x84xf32>
    %215 = vector.extract_strided_slice %209 {offsets = [10, 0], sizes = [2, 84], strides = [1, 1]} : vector<14x84xf32> to vector<2x84xf32>
    %216 = vector.extract_strided_slice %209 {offsets = [12, 0], sizes = [2, 84], strides = [1, 1]} : vector<14x84xf32> to vector<2x84xf32>
    %217 = arith.mulf %210, %210 : vector<2x84xf32>
    %218 = arith.addf %210, %211 : vector<2x84xf32>
    %219 = arith.mulf %211, %211 : vector<2x84xf32>
    %220 = arith.addf %217, %219 : vector<2x84xf32>
    %221 = arith.addf %218, %212 : vector<2x84xf32>
    %222 = arith.mulf %212, %212 : vector<2x84xf32>
    %223 = arith.addf %220, %222 : vector<2x84xf32>
    %224 = arith.addf %221, %213 : vector<2x84xf32>
    %225 = arith.mulf %213, %213 : vector<2x84xf32>
    %226 = arith.addf %223, %225 : vector<2x84xf32>
    %227 = arith.addf %224, %214 : vector<2x84xf32>
    %228 = arith.mulf %214, %214 : vector<2x84xf32>
    %229 = arith.addf %226, %228 : vector<2x84xf32>
    %230 = arith.addf %227, %215 : vector<2x84xf32>
    %231 = arith.mulf %215, %215 : vector<2x84xf32>
    %232 = arith.addf %229, %231 : vector<2x84xf32>
    %233 = arith.addf %230, %216 : vector<2x84xf32>
    %234 = arith.mulf %216, %216 : vector<2x84xf32>
    %235 = arith.addf %232, %234 : vector<2x84xf32>
    %c0_127 = arith.constant 0 : index
    %c0_128 = arith.constant 0 : index
    %236 = vector.load %arg5[%c0_127, %c0_128] : memref<1x84xf32, #tpu.memory_space<vmem>>, vector<1x84xf32>
    %c0_129 = arith.constant 0 : index
    %c0_130 = arith.constant 0 : index
    %237 = vector.load %arg6[%c0_129, %c0_130] : memref<1x84xf32, #tpu.memory_space<vmem>>, vector<1x84xf32>
    %238 = vector.extract_strided_slice %233 {offsets = [0, 0], sizes = [2, 28], strides = [1, 1]} : vector<2x84xf32> to vector<2x28xf32>
    %cst_131 = arith.constant dense<0.000000e+00> : vector<2xf32>
    %239 = vector.multi_reduction <add>, %238, %cst_131 [1] : vector<2x28xf32> to vector<2xf32>
    %240 = vector.shape_cast %239 : vector<2xf32> to vector<2x1xf32>
    %cst_132 = arith.constant 0.00510204071 : f32
    %241 = vector.broadcast %cst_132 : f32 to vector<2x1xf32>
    %242 = arith.mulf %240, %241 : vector<2x1xf32>
    %243 = vector.extract_strided_slice %235 {offsets = [0, 0], sizes = [2, 28], strides = [1, 1]} : vector<2x84xf32> to vector<2x28xf32>
    %cst_133 = arith.constant dense<0.000000e+00> : vector<2xf32>
    %244 = vector.multi_reduction <add>, %243, %cst_133 [1] : vector<2x28xf32> to vector<2xf32>
    %245 = vector.shape_cast %244 : vector<2xf32> to vector<2x1xf32>
    %cst_134 = arith.constant 0.00510204071 : f32
    %246 = vector.broadcast %cst_134 : f32 to vector<2x1xf32>
    %247 = arith.mulf %245, %246 : vector<2x1xf32>
    %248 = arith.mulf %242, %242 : vector<2x1xf32>
    %249 = arith.subf %247, %248 : vector<2x1xf32>
    %cst_135 = arith.constant 9.99999974E-6 : f32
    %250 = vector.broadcast %cst_135 : f32 to vector<2x1xf32>
    %251 = arith.addf %249, %250 : vector<2x1xf32>
    %252 = math.rsqrt %251 : vector<2x1xf32>
    %253 = vector.extract_strided_slice %236 {offsets = [0, 0], sizes = [1, 28], strides = [1, 1]} : vector<1x84xf32> to vector<1x28xf32>
    %254 = vector.broadcast %252 : vector<2x1xf32> to vector<2x28xf32>
    %255 = vector.broadcast %253 : vector<1x28xf32> to vector<2x28xf32>
    %256 = arith.mulf %254, %255 : vector<2x28xf32>
    %257 = vector.extract_strided_slice %237 {offsets = [0, 0], sizes = [1, 28], strides = [1, 1]} : vector<1x84xf32> to vector<1x28xf32>
    %258 = vector.broadcast %242 : vector<2x1xf32> to vector<2x28xf32>
    %259 = arith.mulf %258, %256 : vector<2x28xf32>
    %260 = vector.broadcast %257 : vector<1x28xf32> to vector<2x28xf32>
    %261 = arith.subf %260, %259 : vector<2x28xf32>
    %262 = vector.extract_strided_slice %233 {offsets = [0, 28], sizes = [2, 28], strides = [1, 1]} : vector<2x84xf32> to vector<2x28xf32>
    %cst_136 = arith.constant dense<0.000000e+00> : vector<2xf32>
    %263 = vector.multi_reduction <add>, %262, %cst_136 [1] : vector<2x28xf32> to vector<2xf32>
    %264 = vector.shape_cast %263 : vector<2xf32> to vector<2x1xf32>
    %cst_137 = arith.constant 0.00510204071 : f32
    %265 = vector.broadcast %cst_137 : f32 to vector<2x1xf32>
    %266 = arith.mulf %264, %265 : vector<2x1xf32>
    %267 = vector.extract_strided_slice %235 {offsets = [0, 28], sizes = [2, 28], strides = [1, 1]} : vector<2x84xf32> to vector<2x28xf32>
    %cst_138 = arith.constant dense<0.000000e+00> : vector<2xf32>
    %268 = vector.multi_reduction <add>, %267, %cst_138 [1] : vector<2x28xf32> to vector<2xf32>
    %269 = vector.shape_cast %268 : vector<2xf32> to vector<2x1xf32>
    %cst_139 = arith.constant 0.00510204071 : f32
    %270 = vector.broadcast %cst_139 : f32 to vector<2x1xf32>
    %271 = arith.mulf %269, %270 : vector<2x1xf32>
    %272 = arith.mulf %266, %266 : vector<2x1xf32>
    %273 = arith.subf %271, %272 : vector<2x1xf32>
    %cst_140 = arith.constant 9.99999974E-6 : f32
    %274 = vector.broadcast %cst_140 : f32 to vector<2x1xf32>
    %275 = arith.addf %273, %274 : vector<2x1xf32>
    %276 = math.rsqrt %275 : vector<2x1xf32>
    %277 = vector.extract_strided_slice %236 {offsets = [0, 28], sizes = [1, 28], strides = [1, 1]} : vector<1x84xf32> to vector<1x28xf32>
    %278 = vector.broadcast %276 : vector<2x1xf32> to vector<2x28xf32>
    %279 = vector.broadcast %277 : vector<1x28xf32> to vector<2x28xf32>
    %280 = arith.mulf %278, %279 : vector<2x28xf32>
    %281 = vector.extract_strided_slice %237 {offsets = [0, 28], sizes = [1, 28], strides = [1, 1]} : vector<1x84xf32> to vector<1x28xf32>
    %282 = vector.broadcast %266 : vector<2x1xf32> to vector<2x28xf32>
    %283 = arith.mulf %282, %280 : vector<2x28xf32>
    %284 = vector.broadcast %281 : vector<1x28xf32> to vector<2x28xf32>
    %285 = arith.subf %284, %283 : vector<2x28xf32>
    %286 = vector.extract_strided_slice %233 {offsets = [0, 56], sizes = [2, 28], strides = [1, 1]} : vector<2x84xf32> to vector<2x28xf32>
    %cst_141 = arith.constant dense<0.000000e+00> : vector<2xf32>
    %287 = vector.multi_reduction <add>, %286, %cst_141 [1] : vector<2x28xf32> to vector<2xf32>
    %288 = vector.shape_cast %287 : vector<2xf32> to vector<2x1xf32>
    %cst_142 = arith.constant 0.00510204071 : f32
    %289 = vector.broadcast %cst_142 : f32 to vector<2x1xf32>
    %290 = arith.mulf %288, %289 : vector<2x1xf32>
    %291 = vector.extract_strided_slice %235 {offsets = [0, 56], sizes = [2, 28], strides = [1, 1]} : vector<2x84xf32> to vector<2x28xf32>
    %cst_143 = arith.constant dense<0.000000e+00> : vector<2xf32>
    %292 = vector.multi_reduction <add>, %291, %cst_143 [1] : vector<2x28xf32> to vector<2xf32>
    %293 = vector.shape_cast %292 : vector<2xf32> to vector<2x1xf32>
    %cst_144 = arith.constant 0.00510204071 : f32
    %294 = vector.broadcast %cst_144 : f32 to vector<2x1xf32>
    %295 = arith.mulf %293, %294 : vector<2x1xf32>
    %296 = arith.mulf %290, %290 : vector<2x1xf32>
    %297 = arith.subf %295, %296 : vector<2x1xf32>
    %cst_145 = arith.constant 9.99999974E-6 : f32
    %298 = vector.broadcast %cst_145 : f32 to vector<2x1xf32>
    %299 = arith.addf %297, %298 : vector<2x1xf32>
    %300 = math.rsqrt %299 : vector<2x1xf32>
    %301 = vector.extract_strided_slice %236 {offsets = [0, 56], sizes = [1, 28], strides = [1, 1]} : vector<1x84xf32> to vector<1x28xf32>
    %302 = vector.broadcast %300 : vector<2x1xf32> to vector<2x28xf32>
    %303 = vector.broadcast %301 : vector<1x28xf32> to vector<2x28xf32>
    %304 = arith.mulf %302, %303 : vector<2x28xf32>
    %305 = vector.extract_strided_slice %237 {offsets = [0, 56], sizes = [1, 28], strides = [1, 1]} : vector<1x84xf32> to vector<1x28xf32>
    %306 = vector.broadcast %290 : vector<2x1xf32> to vector<2x28xf32>
    %307 = arith.mulf %306, %304 : vector<2x28xf32>
    %308 = vector.broadcast %305 : vector<1x28xf32> to vector<2x28xf32>
    %309 = arith.subf %308, %307 : vector<2x28xf32>
    %310 = tpu.concatenate %256, %280, %304 in 1 : vector<2x28xf32>, vector<2x28xf32>, vector<2x28xf32> -> vector<2x84xf32>
    %311 = tpu.concatenate %261, %285, %309 in 1 : vector<2x28xf32>, vector<2x28xf32>, vector<2x28xf32> -> vector<2x84xf32>
    %312 = arith.mulf %210, %310 : vector<2x84xf32>
    %313 = arith.addf %312, %311 : vector<2x84xf32>
    %314 = arith.mulf %211, %310 : vector<2x84xf32>
    %315 = arith.addf %314, %311 : vector<2x84xf32>
    %316 = arith.mulf %212, %310 : vector<2x84xf32>
    %317 = arith.addf %316, %311 : vector<2x84xf32>
    %318 = arith.mulf %213, %310 : vector<2x84xf32>
    %319 = arith.addf %318, %311 : vector<2x84xf32>
    %320 = arith.mulf %214, %310 : vector<2x84xf32>
    %321 = arith.addf %320, %311 : vector<2x84xf32>
    %322 = arith.mulf %215, %310 : vector<2x84xf32>
    %323 = arith.addf %322, %311 : vector<2x84xf32>
    %324 = arith.mulf %216, %310 : vector<2x84xf32>
    %325 = arith.addf %324, %311 : vector<2x84xf32>
    %326 = tpu.concatenate %313, %315, %317, %319, %321, %323, %325 in 1 : vector<2x84xf32>, vector<2x84xf32>, vector<2x84xf32>, vector<2x84xf32>, vector<2x84xf32>, vector<2x84xf32>, vector<2x84xf32> -> vector<2x588xf32>
    %327 = arith.truncf %326 : vector<2x588xf32> to vector<2x588xbf16>
    %c0_146 = arith.constant 0 : index
    %c0_147 = arith.constant 0 : index
    %328 = vector.load %arg7[%c0_146, %c0_147] : memref<588x100xbf16, #tpu.memory_space<vmem>>, vector<588x100xbf16>
    %cst_148 = arith.constant dense<0.000000e+00> : vector<2x100xf32>
    %329 = tpu.matmul %327, %328, %cst_148 {dimension_numbers = #tpu.dot_dimension_numbers<[1], [0], [0], [1], [0, 0, 1, 1], [], []>} : vector<2x588xbf16>, vector<588x100xbf16>, vector<2x100xf32> -> vector<2x100xf32>
    %c0_149 = arith.constant 0 : index
    %c0_150 = arith.constant 0 : index
    %330 = vector.load %arg8[%c0_149, %c0_150] : memref<1x100xf32, #tpu.memory_space<vmem>>, vector<1x100xf32>
    %331 = vector.broadcast %330 : vector<1x100xf32> to vector<2x100xf32>
    %332 = arith.addf %329, %331 : vector<2x100xf32>
    %cst_151 = arith.constant 0.000000e+00 : f32
    %333 = vector.broadcast %cst_151 : f32 to vector<2x100xf32>
    %334 = arith.maximumf %332, %333 : vector<2x100xf32>
    %335 = arith.truncf %334 : vector<2x100xf32> to vector<2x100xbf16>
    %c0_152 = arith.constant 0 : index
    %c0_153 = arith.constant 0 : index
    %336 = vector.load %arg9[%c0_152, %c0_153] : memref<100x10xbf16, #tpu.memory_space<vmem>>, vector<100x10xbf16>
    %cst_154 = arith.constant dense<0.000000e+00> : vector<2x10xf32>
    %337 = tpu.matmul %335, %336, %cst_154 {dimension_numbers = #tpu.dot_dimension_numbers<[1], [0], [0], [1], [0, 0, 1, 1], [], []>} : vector<2x100xbf16>, vector<100x10xbf16>, vector<2x10xf32> -> vector<2x10xf32>
    %c0_155 = arith.constant 0 : index
    %c0_156 = arith.constant 0 : index
    %338 = vector.load %arg10[%c0_155, %c0_156] : memref<1x10xf32, #tpu.memory_space<vmem>>, vector<1x10xf32>
    %339 = vector.broadcast %338 : vector<1x10xf32> to vector<2x10xf32>
    %340 = arith.addf %337, %339 : vector<2x10xf32>
    %cst_157 = arith.constant dense<0xFF800000> : vector<10xf32>
    %341 = vector.multi_reduction <maximumf>, %340, %cst_157 [0] : vector<2x10xf32> to vector<10xf32>
    %342 = vector.shape_cast %341 : vector<10xf32> to vector<1x10xf32>
    %343 = vector.broadcast %342 : vector<1x10xf32> to vector<2x10xf32>
    %344 = arith.subf %340, %343 : vector<2x10xf32>
    %345 = math.exp %344 : vector<2x10xf32>
    %cst_158 = arith.constant dense<0.000000e+00> : vector<10xf32>
    %346 = vector.multi_reduction <add>, %345, %cst_158 [0] : vector<2x10xf32> to vector<10xf32>
    %347 = vector.shape_cast %346 : vector<10xf32> to vector<1x10xf32>
    %348 = math.log %347 : vector<1x10xf32>
    %349 = arith.addf %342, %348 : vector<1x10xf32>
    %350 = vector.broadcast %349 : vector<1x10xf32> to vector<2x10xf32>
    %351 = arith.subf %340, %350 : vector<2x10xf32>
    %c0_159 = arith.constant 0 : index
    %c0_160 = arith.constant 0 : index
    %352 = vector.load %arg11[%c0_159, %c0_160] : memref<2x10xf32, #tpu.memory_space<vmem>>, vector<2x10xf32>
    tpu.vector_store %arg11[%c0_159, %c0_160], %351 {strides = array<i32>} : memref<2x10xf32, #tpu.memory_space<vmem>>, vector<2x10xf32>,
    return
  }
}

</mosaic_0001>

<llo_original>
// kernel: classification_model_forward.1
$region0: #{classification_model_forward.1}
  #allocation0 [shape = 'u32[]', space=smem, size = 0x4, offset = 0x4, fixed_abs, tag = 'smem constant byte address 0x4 - core index']
  #allocation1 [shape = 'u32[144,128]{1,0:T(1,128)}', space=vmem, size = 0x12000, scoped, tag = 'internal scratch']
  %s0 = inlined_call_operand.vmem [shape: f32[16,14,275], index: 0, kind: input, shape index: {}]
  %s1 = inlined_call_operand.vmem [shape: f32[9,1,275], index: 1, kind: input, shape index: {}]
  %s2 = inlined_call_operand.vmem [shape: f32[1,275], index: 2, kind: input, shape index: {}]
  %s3 = inlined_call_operand.vmem [shape: bf16[275,84], index: 3, kind: input, shape index: {}]
  %s4 = inlined_call_operand.vmem [shape: f32[1,84], index: 4, kind: input, shape index: {}]
  %s5 = inlined_call_operand.vmem [shape: f32[1,84], index: 5, kind: input, shape index: {}]
  %s6 = inlined_call_operand.vmem [shape: f32[1,84], index: 6, kind: input, shape index: {}]
  %s7 = inlined_call_operand.vmem [shape: bf16[588,100], index: 7, kind: input, shape index: {}]
  %s8 = inlined_call_operand.vmem [shape: f32[1,100], index: 8, kind: input, shape index: {}]
  %s9 = inlined_call_operand.vmem [shape: bf16[100,10], index: 9, kind: input, shape index: {}]
  %s10 = inlined_call_operand.vmem [shape: f32[1,10], index: 10, kind: input, shape index: {}]
  %s11 = inlined_call_operand.hbm [shape: f32[2,10], index: 11, kind: output, shape index: {}]
  %s12 = sld [smem:[#allocation0]]
  $region54: #{classification_model_forward.1} parent=0
    _
  %s14 = ssub.s32 1, %s12
  %s15 = scalar_select 0, %s14, %s12
  $region1: #{classification_model_forward.1} parent=0
    #allocation2 [shape = 'u8[1024]{0}', space=vmem, size = 0x400, scoped, tag = 'output window, operand 0, single buffered']
    #allocation3 [shape = 's32[1]{0}', space=sflag, size = 0x4, scoped, tag = 'scoped memory for classification_model_forward.1']
    %16 = vsyncpa [#allocation3], 0
    // Predicated region
    $region2: #{classification_model_forward.1} parent=1 // pred_check
      _
    $region3: #{classification_model_forward.1} parent=1 // pred_check_branch
      %18 = sbr.rel (0) target = $region5
    $region4: #{classification_model_forward.1} parent=1 // pred_region
      _
    $region5: #{classification_model_forward.1} parent=1 // pred_fallthru
      _
    // Predicated region
    $region6: #{classification_model_forward.1} parent=1 // pred_check
      _
    $region7: #{classification_model_forward.1} parent=1 // pred_check_branch
      %20 = sbr.rel (0) target = $region9
    $region8: #{classification_model_forward.1} parent=1 // pred_region
      _
    $region9: #{classification_model_forward.1} parent=1 // pred_fallthru
      _
    // Predicated region
    $region10: #{classification_model_forward.1} parent=1 // pred_check
      _
    $region11: #{classification_model_forward.1} parent=1 // pred_check_branch
      %22 = sbr.rel (0) target = $region13
    $region12: #{classification_model_forward.1} parent=1 // pred_region
      _
    $region13: #{classification_model_forward.1} parent=1 // pred_fallthru
      _
    // Predicated region
    $region14: #{classification_model_forward.1} parent=1 // pred_check
      _
    $region15: #{classification_model_forward.1} parent=1 // pred_check_branch
      %24 = sbr.rel (0) target = $region17
    $region16: #{classification_model_forward.1} parent=1 // pred_region
      _
    $region17: #{classification_model_forward.1} parent=1 // pred_fallthru
      _
    // Predicated region
    $region18: #{classification_model_forward.1} parent=1 // pred_check
      _
    $region19: #{classification_model_forward.1} parent=1 // pred_check_branch
      %26 = sbr.rel (0) target = $region21
    $region20: #{classification_model_forward.1} parent=1 // pred_region
      _
    $region21: #{classification_model_forward.1} parent=1 // pred_fallthru
      _
    // Predicated region
    $region22: #{classification_model_forward.1} parent=1 // pred_check
      _
    $region23: #{classification_model_forward.1} parent=1 // pred_check_branch
      %28 = sbr.rel (0) target = $region25
    $region24: #{classification_model_forward.1} parent=1 // pred_region
      _
    $region25: #{classification_model_forward.1} parent=1 // pred_fallthru
      _
    // Predicated region
    $region26: #{classification_model_forward.1} parent=1 // pred_check
      _
    $region27: #{classification_model_forward.1} parent=1 // pred_check_branch
      %30 = sbr.rel (0) target = $region29
    $region28: #{classification_model_forward.1} parent=1 // pred_region
      _
    $region29: #{classification_model_forward.1} parent=1 // pred_fallthru
      _
    // Predicated region
    $region30: #{classification_model_forward.1} parent=1 // pred_check
      _
    $region31: #{classification_model_forward.1} parent=1 // pred_check_branch
      %32 = sbr.rel (0) target = $region33
    $region32: #{classification_model_forward.1} parent=1 // pred_region
      _
    $region33: #{classification_model_forward.1} parent=1 // pred_fallthru
      _
    // Predicated region
    $region34: #{classification_model_forward.1} parent=1 // pred_check
      _
    $region35: #{classification_model_forward.1} parent=1 // pred_check_branch
      %34 = sbr.rel (0) target = $region37
    $region36: #{classification_model_forward.1} parent=1 // pred_region
      _
    $region37: #{classification_model_forward.1} parent=1 // pred_fallthru
      _
    // Predicated region
    $region38: #{classification_model_forward.1} parent=1 // pred_check
      _
    $region39: #{classification_model_forward.1} parent=1 // pred_check_branch
      %36 = sbr.rel (0) target = $region41
    $region40: #{classification_model_forward.1} parent=1 // pred_region
      _
    $region41: #{classification_model_forward.1} parent=1 // pred_fallthru
      _
    // Predicated region
    $region42: #{classification_model_forward.1} parent=1 // pred_check
      _
    $region43: #{classification_model_forward.1} parent=1 // pred_check_branch
      %38 = sbr.rel (0) target = $region45
    $region44: #{classification_model_forward.1} parent=1 // pred_region
      _
    $region45: #{classification_model_forward.1} parent=1 // pred_fallthru
      _
    %v40 = vld [vmem:[%s1] sm:$0x7]
    %v41 = vld [vmem:[%s0] sm:$0xff]
    %v42 = vld [vmem:[%s0 + $0x8] sm:$0xff]
    %v43 = vld [vmem:[%s0 + $0x10] sm:$0xff]
    %v44 = vld [vmem:[%s0 + $0x18] sm:$0x3f]
    %v45 = vld [vmem:[%s0 + $0x20] sm:$0x3f]
    %v46 = vld [vmem:[%s0 + $0x28] sm:$0x3f]
    %v48 = vlaneseq
    %v49 = vshrl.u32 %v48, 7
    %v50 = vsub.s32 0, %v49
    %v51 = vrot.slane %v40, %v50
    %v52 = vlaneseq
    %v53 = vshrl.u32 %v52, 7
    %v54 = vsub.s32 1, %v53
    %v55 = vrot.slane %v40, %v54
    %v56 = vlaneseq
    %v57 = vshrl.u32 %v56, 7
    %v58 = vsub.s32 2, %v57
    %v59 = vrot.slane %v40, %v58
    %v63 = vmul.f32 %v51, %v41
    %v64 = vmul.f32 %v55, %v42
    %v65 = vmul.f32 %v59, %v43
    %v66 = vmul.f32 %v51, %v44
    %v67 = vmul.f32 %v55, %v45
    %v68 = vmul.f32 %v59, %v46
    %s69 = scalar_lea.vmem %s0, 48
    %v70 = vld [vmem:[%s69] sm:$0xff]
    %v71 = vld [vmem:[%s69 + $0x8] sm:$0xff]
    %v72 = vld [vmem:[%s69 + $0x10] sm:$0xff]
    %v73 = vld [vmem:[%s69 + $0x18] sm:$0x3f]
    %v74 = vld [vmem:[%s69 + $0x20] sm:$0x3f]
    %v75 = vld [vmem:[%s69 + $0x28] sm:$0x3f]
    %v76 = vmul.f32 %v51, %v70
    %v77 = vmul.f32 %v55, %v71
    %v78 = vmul.f32 %v59, %v72
    %v79 = vmul.f32 %v51, %v73
    %v80 = vmul.f32 %v55, %v74
    %v81 = vmul.f32 %v59, %v75
    %s82 = scalar_lea.vmem %s0, 192
    %v83 = vld [vmem:[%s82] sm:$0xff]
    %v84 = vld [vmem:[%s82 + $0x8] sm:$0xff]
    %v85 = vld [vmem:[%s82 + $0x10] sm:$0xff]
    %v86 = vld [vmem:[%s82 + $0x18] sm:$0x3f]
    %v87 = vld [vmem:[%s82 + $0x20] sm:$0x3f]
    %v88 = vld [vmem:[%s82 + $0x28] sm:$0x3f]
    %v89 = vmul.f32 %v51, %v83
    %v90 = vmul.f32 %v55, %v84
    %v91 = vmul.f32 %v59, %v85
    %v92 = vmul.f32 %v51, %v86
    %v93 = vmul.f32 %v55, %v87
    %v94 = vmul.f32 %v59, %v88
    %s95 = scalar_lea.vmem %s0, 240
    %v96 = vld [vmem:[%s95] sm:$0xff]
    %v97 = vld [vmem:[%s95 + $0x8] sm:$0xff]
    %v98 = vld [vmem:[%s95 + $0x10] sm:$0xff]
    %v99 = vld [vmem:[%s95 + $0x18] sm:$0x3f]
    %v100 = vld [vmem:[%s95 + $0x20] sm:$0x3f]
    %v101 = vld [vmem:[%s95 + $0x28] sm:$0x3f]
    %v102 = vmul.f32 %v51, %v96
    %v103 = vmul.f32 %v55, %v97
    %v104 = vmul.f32 %v59, %v98
    %v105 = vmul.f32 %v51, %v99
    %v106 = vmul.f32 %v55, %v100
    %v107 = vmul.f32 %v59, %v101
    %s108 = scalar_lea.vmem %s1, 3
    %v109 = vld [vmem:[%s108] sm:$0x7]
    %v111 = vlaneseq
    %v112 = vshrl.u32 %v111, 7
    %v113 = vsub.s32 0, %v112
    %v114 = vrot.slane %v109, %v113
    %v115 = vlaneseq
    %v116 = vshrl.u32 %v115, 7
    %v117 = vsub.s32 1, %v116
    %v118 = vrot.slane %v109, %v117
    %v119 = vlaneseq
    %v120 = vshrl.u32 %v119, 7
    %v121 = vsub.s32 2, %v120
    %v122 = vrot.slane %v109, %v121
    %v126 = vmul.f32 %v114, %v70
    %v127 = vmul.f32 %v118, %v71
    %v128 = vmul.f32 %v122, %v72
    %v129 = vmul.f32 %v114, %v73
    %v130 = vmul.f32 %v118, %v74
    %v131 = vmul.f32 %v122, %v75
    %v132 = vadd.f32 %v63, %v126
    %v133 = vadd.f32 %v64, %v127
    %v134 = vadd.f32 %v65, %v128
    %v135 = vadd.f32 %v66, %v129
    %v136 = vadd.f32 %v67, %v130
    %v137 = vadd.f32 %v68, %v131
    %s138 = scalar_lea.vmem %s0, 96
    %v139 = vld [vmem:[%s138] sm:$0xff]
    %v140 = vld [vmem:[%s138 + $0x8] sm:$0xff]
    %v141 = vld [vmem:[%s138 + $0x10] sm:$0xff]
    %v142 = vld [vmem:[%s138 + $0x18] sm:$0x3f]
    %v143 = vld [vmem:[%s138 + $0x20] sm:$0x3f]
    %v144 = vld [vmem:[%s138 + $0x28] sm:$0x3f]
    %v145 = vmul.f32 %v114, %v139
    %v146 = vmul.f32 %v118, %v140
    %v147 = vmul.f32 %v122, %v141
    %v148 = vmul.f32 %v114, %v142
    %v149 = vmul.f32 %v118, %v143
    %v150 = vmul.f32 %v122, %v144
    %v151 = vadd.f32 %v76, %v145
    %v152 = vadd.f32 %v77, %v146
    %v153 = vadd.f32 %v78, %v147
    %v154 = vadd.f32 %v79, %v148
    %v155 = vadd.f32 %v80, %v149
    %v156 = vadd.f32 %v81, %v150
    %v157 = vmul.f32 %v114, %v96
    %v158 = vmul.f32 %v118, %v97
    %v159 = vmul.f32 %v122, %v98
    %v160 = vmul.f32 %v114, %v99
    %v161 = vmul.f32 %v118, %v100
    %v162 = vmul.f32 %v122, %v101
    %v163 = vadd.f32 %v89, %v157
    %v164 = vadd.f32 %v90, %v158
    %v165 = vadd.f32 %v91, %v159
    %v166 = vadd.f32 %v92, %v160
    %v167 = vadd.f32 %v93, %v161
    %v168 = vadd.f32 %v94, %v162
    %s169 = scalar_lea.vmem %s0, 288
    %v170 = vld [vmem:[%s169] sm:$0xff]
    %v171 = vld [vmem:[%s169 + $0x8] sm:$0xff]
    %v172 = vld [vmem:[%s169 + $0x10] sm:$0xff]
    %v173 = vld [vmem:[%s169 + $0x18] sm:$0x3f]
    %v174 = vld [vmem:[%s169 + $0x20] sm:$0x3f]
    %v175 = vld [vmem:[%s169 + $0x28] sm:$0x3f]
    %v176 = vmul.f32 %v114, %v170
    %v177 = vmul.f32 %v118, %v171
    %v178 = vmul.f32 %v122, %v172
    %v179 = vmul.f32 %v114, %v173
    %v180 = vmul.f32 %v118, %v174
    %v181 = vmul.f32 %v122, %v175
    %v182 = vadd.f32 %v102, %v176
    %v183 = vadd.f32 %v103, %v177
    %v184 = vadd.f32 %v104, %v178
    %v185 = vadd.f32 %v105, %v179
    %v186 = vadd.f32 %v106, %v180
    %v187 = vadd.f32 %v107, %v181
    %s188 = scalar_lea.vmem %s1, 6
    %v189 = vld [vmem:[%s188] sm:$0x7]
    %v191 = vlaneseq
    %v192 = vshrl.u32 %v191, 7
    %v193 = vsub.s32 0, %v192
    %v194 = vrot.slane %v189, %v193
    %v195 = vlaneseq
    %v196 = vshrl.u32 %v195, 7
    %v197 = vsub.s32 1, %v196
    %v198 = vrot.slane %v189, %v197
    %v199 = vlaneseq
    %v200 = vshrl.u32 %v199, 7
    %v201 = vsub.s32 2, %v200
    %v202 = vrot.slane %v189, %v201
    %v206 = vmul.f32 %v194, %v139
    %v207 = vmul.f32 %v198, %v140
    %v208 = vmul.f32 %v202, %v141
    %v209 = vmul.f32 %v194, %v142
    %v210 = vmul.f32 %v198, %v143
    %v211 = vmul.f32 %v202, %v144
    %v212 = vadd.f32 %v132, %v206
    %v213 = vadd.f32 %v133, %v207
    %v214 = vadd.f32 %v134, %v208
    %v215 = vadd.f32 %v135, %v209
    %v216 = vadd.f32 %v136, %v210
    %v217 = vadd.f32 %v137, %v211
    %s218 = scalar_lea.vmem %s0, 144
    %v219 = vld [vmem:[%s218] sm:$0xff]
    %v220 = vld [vmem:[%s218 + $0x8] sm:$0xff]
    %v221 = vld [vmem:[%s218 + $0x10] sm:$0xff]
    %v222 = vld [vmem:[%s218 + $0x18] sm:$0x3f]
    %v223 = vld [vmem:[%s218 + $0x20] sm:$0x3f]
    %v224 = vld [vmem:[%s218 + $0x28] sm:$0x3f]
    %v225 = vmul.f32 %v194, %v219
    %v226 = vmul.f32 %v198, %v220
    %v227 = vmul.f32 %v202, %v221
    %v228 = vmul.f32 %v194, %v222
    %v229 = vmul.f32 %v198, %v223
    %v230 = vmul.f32 %v202, %v224
    %v231 = vadd.f32 %v151, %v225
    %v232 = vadd.f32 %v152, %v226
    %v233 = vadd.f32 %v153, %v227
    %v234 = vadd.f32 %v154, %v228
    %v235 = vadd.f32 %v155, %v229
    %v236 = vadd.f32 %v156, %v230
    %v237 = vmul.f32 %v194, %v170
    %v238 = vmul.f32 %v198, %v171
    %v239 = vmul.f32 %v202, %v172
    %v240 = vmul.f32 %v194, %v173
    %v241 = vmul.f32 %v198, %v174
    %v242 = vmul.f32 %v202, %v175
    %v243 = vadd.f32 %v163, %v237
    %v244 = vadd.f32 %v164, %v238
    %v245 = vadd.f32 %v165, %v239
    %v246 = vadd.f32 %v166, %v240
    %v247 = vadd.f32 %v167, %v241
    %v248 = vadd.f32 %v168, %v242
    %s249 = scalar_lea.vmem %s0, 336
    %v250 = vld [vmem:[%s249] sm:$0xff]
    %v251 = vld [vmem:[%s249 + $0x8] sm:$0xff]
    %v252 = vld [vmem:[%s249 + $0x10] sm:$0xff]
    %v253 = vld [vmem:[%s249 + $0x18] sm:$0x3f]
    %v254 = vld [vmem:[%s249 + $0x20] sm:$0x3f]
    %v255 = vld [vmem:[%s249 + $0x28] sm:$0x3f]
    %v256 = vmul.f32 %v194, %v250
    %v257 = vmul.f32 %v198, %v251
    %v258 = vmul.f32 %v202, %v252
    %v259 = vmul.f32 %v194, %v253
    %v260 = vmul.f32 %v198, %v254
    %v261 = vmul.f32 %v202, %v255
    %v262 = vadd.f32 %v182, %v256
    %v263 = vadd.f32 %v183, %v257
    %v264 = vadd.f32 %v184, %v258
    %v265 = vadd.f32 %v185, %v259
    %v266 = vadd.f32 %v186, %v260
    %v267 = vadd.f32 %v187, %v261
    %s268 = scalar_lea.vmem %s1, 9
    %v269 = vld [vmem:[%s268] sm:$0x7]
    %v271 = vlaneseq
    %v272 = vshrl.u32 %v271, 7
    %v273 = vsub.s32 0, %v272
    %v274 = vrot.slane %v269, %v273
    %v275 = vlaneseq
    %v276 = vshrl.u32 %v275, 7
    %v277 = vsub.s32 1, %v276
    %v278 = vrot.slane %v269, %v277
    %v279 = vlaneseq
    %v280 = vshrl.u32 %v279, 7
    %v281 = vsub.s32 2, %v280
    %v282 = vrot.slane %v269, %v281
    %v286 = vmul.f32 %v274, %v83
    %v287 = vmul.f32 %v278, %v84
    %v288 = vmul.f32 %v282, %v85
    %v289 = vmul.f32 %v274, %v86
    %v290 = vmul.f32 %v278, %v87
    %v291 = vmul.f32 %v282, %v88
    %v292 = vadd.f32 %v212, %v286
    %v293 = vadd.f32 %v213, %v287
    %v294 = vadd.f32 %v214, %v288
    %v295 = vadd.f32 %v215, %v289
    %v296 = vadd.f32 %v216, %v290
    %v297 = vadd.f32 %v217, %v291
    %v298 = vmul.f32 %v274, %v96
    %v299 = vmul.f32 %v278, %v97
    %v300 = vmul.f32 %v282, %v98
    %v301 = vmul.f32 %v274, %v99
    %v302 = vmul.f32 %v278, %v100
    %v303 = vmul.f32 %v282, %v101
    %v304 = vadd.f32 %v231, %v298
    %v305 = vadd.f32 %v232, %v299
    %v306 = vadd.f32 %v233, %v300
    %v307 = vadd.f32 %v234, %v301
    %v308 = vadd.f32 %v235, %v302
    %v309 = vadd.f32 %v236, %v303
    %s310 = scalar_lea.vmem %s0, 384
    %v311 = vld [vmem:[%s310] sm:$0xff]
    %v312 = vld [vmem:[%s310 + $0x8] sm:$0xff]
    %v313 = vld [vmem:[%s310 + $0x10] sm:$0xff]
    %v314 = vld [vmem:[%s310 + $0x18] sm:$0x3f]
    %v315 = vld [vmem:[%s310 + $0x20] sm:$0x3f]
    %v316 = vld [vmem:[%s310 + $0x28] sm:$0x3f]
    %v317 = vmul.f32 %v274, %v311
    %v318 = vmul.f32 %v278, %v312
    %v319 = vmul.f32 %v282, %v313
    %v320 = vmul.f32 %v274, %v314
    %v321 = vmul.f32 %v278, %v315
    %v322 = vmul.f32 %v282, %v316
    %v323 = vadd.f32 %v243, %v317
    %v324 = vadd.f32 %v244, %v318
    %v325 = vadd.f32 %v245, %v319
    %v326 = vadd.f32 %v246, %v320
    %v327 = vadd.f32 %v247, %v321
    %v328 = vadd.f32 %v248, %v322
    %s329 = scalar_lea.vmem %s0, 432
    %v330 = vld [vmem:[%s329] sm:$0xff]
    %v331 = vld [vmem:[%s329 + $0x8] sm:$0xff]
    %v332 = vld [vmem:[%s329 + $0x10] sm:$0xff]
    %v333 = vld [vmem:[%s329 + $0x18] sm:$0x3f]
    %v334 = vld [vmem:[%s329 + $0x20] sm:$0x3f]
    %v335 = vld [vmem:[%s329 + $0x28] sm:$0x3f]
    %v336 = vmul.f32 %v274, %v330
    %v337 = vmul.f32 %v278, %v331
    %v338 = vmul.f32 %v282, %v332
    %v339 = vmul.f32 %v274, %v333
    %v340 = vmul.f32 %v278, %v334
    %v341 = vmul.f32 %v282, %v335
    %v342 = vadd.f32 %v262, %v336
    %v343 = vadd.f32 %v263, %v337
    %v344 = vadd.f32 %v264, %v338
    %v345 = vadd.f32 %v265, %v339
    %v346 = vadd.f32 %v266, %v340
    %v347 = vadd.f32 %v267, %v341
    %s348 = scalar_lea.vmem %s1, 12
    %v349 = vld [vmem:[%s348] sm:$0x7]
    %v351 = vlaneseq
    %v352 = vshrl.u32 %v351, 7
    %v353 = vsub.s32 0, %v352
    %v354 = vrot.slane %v349, %v353
    %v355 = vlaneseq
    %v356 = vshrl.u32 %v355, 7
    %v357 = vsub.s32 1, %v356
    %v358 = vrot.slane %v349, %v357
    %v359 = vlaneseq
    %v360 = vshrl.u32 %v359, 7
    %v361 = vsub.s32 2, %v360
    %v362 = vrot.slane %v349, %v361
    %v366 = vmul.f32 %v354, %v96
    %v367 = vmul.f32 %v358, %v97
    %v368 = vmul.f32 %v362, %v98
    %v369 = vmul.f32 %v354, %v99
    %v370 = vmul.f32 %v358, %v100
    %v371 = vmul.f32 %v362, %v101
    %v372 = vadd.f32 %v292, %v366
    %v373 = vadd.f32 %v293, %v367
    %v374 = vadd.f32 %v294, %v368
    %v375 = vadd.f32 %v295, %v369
    %v376 = vadd.f32 %v296, %v370
    %v377 = vadd.f32 %v297, %v371
    %v378 = vmul.f32 %v354, %v170
    %v379 = vmul.f32 %v358, %v171
    %v380 = vmul.f32 %v362, %v172
    %v381 = vmul.f32 %v354, %v173
    %v382 = vmul.f32 %v358, %v174
    %v383 = vmul.f32 %v362, %v175
    %v384 = vadd.f32 %v304, %v378
    %v385 = vadd.f32 %v305, %v379
    %v386 = vadd.f32 %v306, %v380
    %v387 = vadd.f32 %v307, %v381
    %v388 = vadd.f32 %v308, %v382
    %v389 = vadd.f32 %v309, %v383
    %v390 = vmul.f32 %v354, %v330
    %v391 = vmul.f32 %v358, %v331
    %v392 = vmul.f32 %v362, %v332
    %v393 = vmul.f32 %v354, %v333
    %v394 = vmul.f32 %v358, %v334
    %v395 = vmul.f32 %v362, %v335
    %v396 = vadd.f32 %v323, %v390
    %v397 = vadd.f32 %v324, %v391
    %v398 = vadd.f32 %v325, %v392
    %v399 = vadd.f32 %v326, %v393
    %v400 = vadd.f32 %v327, %v394
    %v401 = vadd.f32 %v328, %v395
    %s402 = scalar_lea.vmem %s0, 480
    %v403 = vld [vmem:[%s402] sm:$0xff]
    %v404 = vld [vmem:[%s402 + $0x8] sm:$0xff]
    %v405 = vld [vmem:[%s402 + $0x10] sm:$0xff]
    %v406 = vld [vmem:[%s402 + $0x18] sm:$0x3f]
    %v407 = vld [vmem:[%s402 + $0x20] sm:$0x3f]
    %v408 = vld [vmem:[%s402 + $0x28] sm:$0x3f]
    %v409 = vmul.f32 %v354, %v403
    %v410 = vmul.f32 %v358, %v404
    %v411 = vmul.f32 %v362, %v405
    %v412 = vmul.f32 %v354, %v406
    %v413 = vmul.f32 %v358, %v407
    %v414 = vmul.f32 %v362, %v408
    %v415 = vadd.f32 %v342, %v409
    %v416 = vadd.f32 %v343, %v410
    %v417 = vadd.f32 %v344, %v411
    %v418 = vadd.f32 %v345, %v412
    %v419 = vadd.f32 %v346, %v413
    %v420 = vadd.f32 %v347, %v414
    %s421 = scalar_lea.vmem %s1, 15
    %v422 = vld [vmem:[%s421] sm:$0x7]
    %v424 = vlaneseq
    %v425 = vshrl.u32 %v424, 7
    %v426 = vsub.s32 0, %v425
    %v427 = vrot.slane %v422, %v426
    %v428 = vlaneseq
    %v429 = vshrl.u32 %v428, 7
    %v430 = vsub.s32 1, %v429
    %v431 = vrot.slane %v422, %v430
    %v432 = vlaneseq
    %v433 = vshrl.u32 %v432, 7
    %v434 = vsub.s32 2, %v433
    %v435 = vrot.slane %v422, %v434
    %v439 = vmul.f32 %v427, %v170
    %v440 = vmul.f32 %v431, %v171
    %v441 = vmul.f32 %v435, %v172
    %v442 = vmul.f32 %v427, %v173
    %v443 = vmul.f32 %v431, %v174
    %v444 = vmul.f32 %v435, %v175
    %v445 = vadd.f32 %v372, %v439
    %v446 = vadd.f32 %v373, %v440
    %v447 = vadd.f32 %v374, %v441
    %v448 = vadd.f32 %v375, %v442
    %v449 = vadd.f32 %v376, %v443
    %v450 = vadd.f32 %v377, %v444
    %v451 = vmul.f32 %v427, %v250
    %v452 = vmul.f32 %v431, %v251
    %v453 = vmul.f32 %v435, %v252
    %v454 = vmul.f32 %v427, %v253
    %v455 = vmul.f32 %v431, %v254
    %v456 = vmul.f32 %v435, %v255
    %v457 = vadd.f32 %v384, %v451
    %v458 = vadd.f32 %v385, %v452
    %v459 = vadd.f32 %v386, %v453
    %v460 = vadd.f32 %v387, %v454
    %v461 = vadd.f32 %v388, %v455
    %v462 = vadd.f32 %v389, %v456
    %v463 = vmul.f32 %v427, %v403
    %v464 = vmul.f32 %v431, %v404
    %v465 = vmul.f32 %v435, %v405
    %v466 = vmul.f32 %v427, %v406
    %v467 = vmul.f32 %v431, %v407
    %v468 = vmul.f32 %v435, %v408
    %v469 = vadd.f32 %v396, %v463
    %v470 = vadd.f32 %v397, %v464
    %v471 = vadd.f32 %v398, %v465
    %v472 = vadd.f32 %v399, %v466
    %v473 = vadd.f32 %v400, %v467
    %v474 = vadd.f32 %v401, %v468
    %s475 = scalar_lea.vmem %s0, 528
    %v476 = vld [vmem:[%s475] sm:$0xff]
    %v477 = vld [vmem:[%s475 + $0x8] sm:$0xff]
    %v478 = vld [vmem:[%s475 + $0x10] sm:$0xff]
    %v479 = vld [vmem:[%s475 + $0x18] sm:$0x3f]
    %v480 = vld [vmem:[%s475 + $0x20] sm:$0x3f]
    %v481 = vld [vmem:[%s475 + $0x28] sm:$0x3f]
    %v482 = vmul.f32 %v427, %v476
    %v483 = vmul.f32 %v431, %v477
    %v484 = vmul.f32 %v435, %v478
    %v485 = vmul.f32 %v427, %v479
    %v486 = vmul.f32 %v431, %v480
    %v487 = vmul.f32 %v435, %v481
    %v488 = vadd.f32 %v415, %v482
    %v489 = vadd.f32 %v416, %v483
    %v490 = vadd.f32 %v417, %v484
    %v491 = vadd.f32 %v418, %v485
    %v492 = vadd.f32 %v419, %v486
    %v493 = vadd.f32 %v420, %v487
    %s494 = scalar_lea.vmem %s1, 18
    %v495 = vld [vmem:[%s494] sm:$0x7]
    %v497 = vlaneseq
    %v498 = vshrl.u32 %v497, 7
    %v499 = vsub.s32 0, %v498
    %v500 = vrot.slane %v495, %v499
    %v501 = vlaneseq
    %v502 = vshrl.u32 %v501, 7
    %v503 = vsub.s32 1, %v502
    %v504 = vrot.slane %v495, %v503
    %v505 = vlaneseq
    %v506 = vshrl.u32 %v505, 7
    %v507 = vsub.s32 2, %v506
    %v508 = vrot.slane %v495, %v507
    %v512 = vmul.f32 %v500, %v311
    %v513 = vmul.f32 %v504, %v312
    %v514 = vmul.f32 %v508, %v313
    %v515 = vmul.f32 %v500, %v314
    %v516 = vmul.f32 %v504, %v315
    %v517 = vmul.f32 %v508, %v316
    %v518 = vadd.f32 %v445, %v512
    %v519 = vadd.f32 %v446, %v513
    %v520 = vadd.f32 %v447, %v514
    %v521 = vadd.f32 %v448, %v515
    %v522 = vadd.f32 %v449, %v516
    %v523 = vadd.f32 %v450, %v517
    %v524 = vmul.f32 %v500, %v330
    %v525 = vmul.f32 %v504, %v331
    %v526 = vmul.f32 %v508, %v332
    %v527 = vmul.f32 %v500, %v333
    %v528 = vmul.f32 %v504, %v334
    %v529 = vmul.f32 %v508, %v335
    %v530 = vadd.f32 %v457, %v524
    %v531 = vadd.f32 %v458, %v525
    %v532 = vadd.f32 %v459, %v526
    %v533 = vadd.f32 %v460, %v527
    %v534 = vadd.f32 %v461, %v528
    %v535 = vadd.f32 %v462, %v529
    %s536 = scalar_lea.vmem %s0, 576
    %v537 = vld [vmem:[%s536] sm:$0xff]
    %v538 = vld [vmem:[%s536 + $0x8] sm:$0xff]
    %v539 = vld [vmem:[%s536 + $0x10] sm:$0xff]
    %v540 = vld [vmem:[%s536 + $0x18] sm:$0x3f]
    %v541 = vld [vmem:[%s536 + $0x20] sm:$0x3f]
    %v542 = vld [vmem:[%s536 + $0x28] sm:$0x3f]
    %v543 = vmul.f32 %v500, %v537
    %v544 = vmul.f32 %v504, %v538
    %v545 = vmul.f32 %v508, %v539
    %v546 = vmul.f32 %v500, %v540
    %v547 = vmul.f32 %v504, %v541
    %v548 = vmul.f32 %v508, %v542
    %v549 = vadd.f32 %v469, %v543
    %v550 = vadd.f32 %v470, %v544
    %v551 = vadd.f32 %v471, %v545
    %v552 = vadd.f32 %v472, %v546
    %v553 = vadd.f32 %v473, %v547
    %v554 = vadd.f32 %v474, %v548
    %s555 = scalar_lea.vmem %s0, 624
    %v556 = vld [vmem:[%s555] sm:$0xff]
    %v557 = vld [vmem:[%s555 + $0x8] sm:$0xff]
    %v558 = vld [vmem:[%s555 + $0x10] sm:$0xff]
    %v559 = vld [vmem:[%s555 + $0x18] sm:$0x3f]
    %v560 = vld [vmem:[%s555 + $0x20] sm:$0x3f]
    %v561 = vld [vmem:[%s555 + $0x28] sm:$0x3f]
    %v562 = vmul.f32 %v500, %v556
    %v563 = vmul.f32 %v504, %v557
    %v564 = vmul.f32 %v508, %v558
    %v565 = vmul.f32 %v500, %v559
    %v566 = vmul.f32 %v504, %v560
    %v567 = vmul.f32 %v508, %v561
    %v568 = vadd.f32 %v488, %v562
    %v569 = vadd.f32 %v489, %v563
    %v570 = vadd.f32 %v490, %v564
    %v571 = vadd.f32 %v491, %v565
    %v572 = vadd.f32 %v492, %v566
    %v573 = vadd.f32 %v493, %v567
    %s574 = scalar_lea.vmem %s1, 21
    %v575 = vld [vmem:[%s574] sm:$0x7]
    %v577 = vlaneseq
    %v578 = vshrl.u32 %v577, 7
    %v579 = vsub.s32 0, %v578
    %v580 = vrot.slane %v575, %v579
    %v581 = vlaneseq
    %v582 = vshrl.u32 %v581, 7
    %v583 = vsub.s32 1, %v582
    %v584 = vrot.slane %v575, %v583
    %v585 = vlaneseq
    %v586 = vshrl.u32 %v585, 7
    %v587 = vsub.s32 2, %v586
    %v588 = vrot.slane %v575, %v587
    %v592 = vmul.f32 %v580, %v330
    %v593 = vmul.f32 %v584, %v331
    %v594 = vmul.f32 %v588, %v332
    %v595 = vmul.f32 %v580, %v333
    %v596 = vmul.f32 %v584, %v334
    %v597 = vmul.f32 %v588, %v335
    %v598 = vadd.f32 %v518, %v592
    %v599 = vadd.f32 %v519, %v593
    %v600 = vadd.f32 %v520, %v594
    %v601 = vadd.f32 %v521, %v595
    %v602 = vadd.f32 %v522, %v596
    %v603 = vadd.f32 %v523, %v597
    %v604 = vmul.f32 %v580, %v403
    %v605 = vmul.f32 %v584, %v404
    %v606 = vmul.f32 %v588, %v405
    %v607 = vmul.f32 %v580, %v406
    %v608 = vmul.f32 %v584, %v407
    %v609 = vmul.f32 %v588, %v408
    %v610 = vadd.f32 %v530, %v604
    %v611 = vadd.f32 %v531, %v605
    %v612 = vadd.f32 %v532, %v606
    %v613 = vadd.f32 %v533, %v607
    %v614 = vadd.f32 %v534, %v608
    %v615 = vadd.f32 %v535, %v609
    %v616 = vmul.f32 %v580, %v556
    %v617 = vmul.f32 %v584, %v557
    %v618 = vmul.f32 %v588, %v558
    %v619 = vmul.f32 %v580, %v559
    %v620 = vmul.f32 %v584, %v560
    %v621 = vmul.f32 %v588, %v561
    %v622 = vadd.f32 %v549, %v616
    %v623 = vadd.f32 %v550, %v617
    %v624 = vadd.f32 %v551, %v618
    %v625 = vadd.f32 %v552, %v619
    %v626 = vadd.f32 %v553, %v620
    %v627 = vadd.f32 %v554, %v621
    %s628 = scalar_lea.vmem %s0, 672
    %v629 = vld [vmem:[%s628] sm:$0xff]
    %v630 = vld [vmem:[%s628 + $0x8] sm:$0xff]
    %v631 = vld [vmem:[%s628 + $0x10] sm:$0xff]
    %v632 = vld [vmem:[%s628 + $0x18] sm:$0x3f]
    %v633 = vld [vmem:[%s628 + $0x20] sm:$0x3f]
    %v634 = vld [vmem:[%s628 + $0x28] sm:$0x3f]
    %v635 = vmul.f32 %v580, %v629
    %v636 = vmul.f32 %v584, %v630
    %v637 = vmul.f32 %v588, %v631
    %v638 = vmul.f32 %v580, %v632
    %v639 = vmul.f32 %v584, %v633
    %v640 = vmul.f32 %v588, %v634
    %v641 = vadd.f32 %v568, %v635
    %v642 = vadd.f32 %v569, %v636
    %v643 = vadd.f32 %v570, %v637
    %v644 = vadd.f32 %v571, %v638
    %v645 = vadd.f32 %v572, %v639
    %v646 = vadd.f32 %v573, %v640
    %s647 = scalar_lea.vmem %s1, 24
    %v648 = vld [vmem:[%s647] sm:$0x7]
    %v650 = vlaneseq
    %v651 = vshrl.u32 %v650, 7
    %v652 = vsub.s32 0, %v651
    %v653 = vrot.slane %v648, %v652
    %v654 = vlaneseq
    %v655 = vshrl.u32 %v654, 7
    %v656 = vsub.s32 1, %v655
    %v657 = vrot.slane %v648, %v656
    %v658 = vlaneseq
    %v659 = vshrl.u32 %v658, 7
    %v660 = vsub.s32 2, %v659
    %v661 = vrot.slane %v648, %v660
    %v665 = vmul.f32 %v653, %v403
    %v666 = vmul.f32 %v657, %v404
    %v667 = vmul.f32 %v661, %v405
    %v668 = vmul.f32 %v653, %v406
    %v669 = vmul.f32 %v657, %v407
    %v670 = vmul.f32 %v661, %v408
    %v671 = vadd.f32 %v598, %v665
    %v672 = vadd.f32 %v599, %v666
    %v673 = vadd.f32 %v600, %v667
    %v674 = vadd.f32 %v601, %v668
    %v675 = vadd.f32 %v602, %v669
    %v676 = vadd.f32 %v603, %v670
    %v677 = vmul.f32 %v653, %v476
    %v678 = vmul.f32 %v657, %v477
    %v679 = vmul.f32 %v661, %v478
    %v680 = vmul.f32 %v653, %v479
    %v681 = vmul.f32 %v657, %v480
    %v682 = vmul.f32 %v661, %v481
    %v683 = vadd.f32 %v610, %v677
    %v684 = vadd.f32 %v611, %v678
    %v685 = vadd.f32 %v612, %v679
    %v686 = vadd.f32 %v613, %v680
    %v687 = vadd.f32 %v614, %v681
    %v688 = vadd.f32 %v615, %v682
    %v689 = vmul.f32 %v653, %v629
    %v690 = vmul.f32 %v657, %v630
    %v691 = vmul.f32 %v661, %v631
    %v692 = vmul.f32 %v653, %v632
    %v693 = vmul.f32 %v657, %v633
    %v694 = vmul.f32 %v661, %v634
    %v695 = vadd.f32 %v622, %v689
    %v696 = vadd.f32 %v623, %v690
    %v697 = vadd.f32 %v624, %v691
    %v698 = vadd.f32 %v625, %v692
    %v699 = vadd.f32 %v626, %v693
    %v700 = vadd.f32 %v627, %v694
    %s701 = scalar_lea.vmem %s0, 720
    %v702 = vld [vmem:[%s701] sm:$0xff]
    %v703 = vld [vmem:[%s701 + $0x8] sm:$0xff]
    %v704 = vld [vmem:[%s701 + $0x10] sm:$0xff]
    %v705 = vld [vmem:[%s701 + $0x18] sm:$0x3f]
    %v706 = vld [vmem:[%s701 + $0x20] sm:$0x3f]
    %v707 = vld [vmem:[%s701 + $0x28] sm:$0x3f]
    %v708 = vmul.f32 %v653, %v702
    %v709 = vmul.f32 %v657, %v703
    %v710 = vmul.f32 %v661, %v704
    %v711 = vmul.f32 %v653, %v705
    %v712 = vmul.f32 %v657, %v706
    %v713 = vmul.f32 %v661, %v707
    %v714 = vadd.f32 %v641, %v708
    %v715 = vadd.f32 %v642, %v709
    %v716 = vadd.f32 %v643, %v710
    %v717 = vadd.f32 %v644, %v711
    %v718 = vadd.f32 %v645, %v712
    %v719 = vadd.f32 %v646, %v713
    %v720 = vmax.f32 %v671, %v683
    %v721 = vmax.f32 %v672, %v684
    %v722 = vmax.f32 %v673, %v685
    %v723 = vmax.f32 %v674, %v686
    %v724 = vmax.f32 %v675, %v687
    %v725 = vmax.f32 %v676, %v688
    %v726 = vmax.f32 %v695, %v714
    %v727 = vmax.f32 %v696, %v715
    %v728 = vmax.f32 %v697, %v716
    %v729 = vmax.f32 %v698, %v717
    %v730 = vmax.f32 %v699, %v718
    %v731 = vmax.f32 %v700, %v719
    %v732 = vmax.f32 %v720, %v726
    %v733 = vmax.f32 %v721, %v727
    %v734 = vmax.f32 %v722, %v728
    %v735 = vmax.f32 %v723, %v729
    %v736 = vmax.f32 %v724, %v730
    %v737 = vmax.f32 %v725, %v731
    %v738 = vld [vmem:[%s2] sm:$0x7]
    %v740 = vlaneseq
    %v741 = vshrl.u32 %v740, 7
    %v742 = vsub.s32 0, %v741
    %v743 = vrot.slane %v738, %v742
    %v744 = vlaneseq
    %v745 = vshrl.u32 %v744, 7
    %v746 = vsub.s32 1, %v745
    %v747 = vrot.slane %v738, %v746
    %v748 = vlaneseq
    %v749 = vshrl.u32 %v748, 7
    %v750 = vsub.s32 2, %v749
    %v751 = vrot.slane %v738, %v750
    %v755 = vadd.f32 %v732, %v743
    %v756 = vadd.f32 %v733, %v747
    %v757 = vadd.f32 %v734, %v751
    %v758 = vadd.f32 %v735, %v743
    %v759 = vadd.f32 %v736, %v747
    %v760 = vadd.f32 %v737, %v751
    %v761 = vmax.f32 %v755, 0.0
    %v762 = vmax.f32 %v756, 0.0
    %v763 = vmax.f32 %v757, 0.0
    %v764 = vmax.f32 %v758, 0.0
    %v765 = vmax.f32 %v759, 0.0
    %v766 = vmax.f32 %v760, 0.0
    %v767 = vpack.c.bf16 %v764, %v761
    %v768 = vpack.c.bf16 %v765, %v762
    %v769 = vpack.c.bf16 %v766, %v763
    %v770 = vld [vmem:[%s3] sm:$0xf]
    %v771 = vld [vmem:[%s3 + $0x4] sm:$0xf]
    %v772 = vld [vmem:[%s3 + $0x8] sm:$0xf]
    %v773 = vld [vmem:[%s3 + $0xc] sm:$0xf]
    %v774 = vld [vmem:[%s3 + $0x10] sm:$0xf]
    %v775 = vld [vmem:[%s3 + $0x14] sm:$0xf]
    %v776 = vld [vmem:[%s3 + $0x18] sm:$0xf]
    %v777 = vld [vmem:[%s3 + $0x1c] sm:$0xf]
    %v778 = vld [vmem:[%s3 + $0x20] sm:$0xf]
    %v779 = vld [vmem:[%s3 + $0x24] sm:$0xf]
    %v780 = vld [vmem:[%s3 + $0x28] sm:$0xf]
    %v781 = vld [vmem:[%s3 + $0x2c] sm:$0xf]
    %v782 = vld [vmem:[%s3 + $0x30] sm:$0xf]
    %v783 = vld [vmem:[%s3 + $0x34] sm:$0xf]
    %v784 = vld [vmem:[%s3 + $0x38] sm:$0xf]
    %v785 = vld [vmem:[%s3 + $0x3c] sm:$0xf]
    %v786 = vld [vmem:[%s3 + $0x40] sm:$0xf]
    %v787 = vld [vmem:[%s3 + $0x44] sm:$0xf]
    %v788 = vld [vmem:[%s3 + $0x48] sm:$0xf]
    %v789 = vld [vmem:[%s3 + $0x4c] sm:$0xf]
    %v790 = vld [vmem:[%s3 + $0x50] sm:$0xf]
    %v791 = vld [vmem:[%s3 + $0x54] sm:$0xf]
    %v792 = vld [vmem:[%s3 + $0x58] sm:$0xf]
    %v793 = vld [vmem:[%s3 + $0x5c] sm:$0xf]
    %v794 = vld [vmem:[%s3 + $0x60] sm:$0xf]
    %v795 = vld [vmem:[%s3 + $0x64] sm:$0xf]
    %v796 = vld [vmem:[%s3 + $0x68] sm:$0xf]
    %v797 = vld [vmem:[%s3 + $0x6c] sm:$0xf]
    %v798 = vld [vmem:[%s3 + $0x70] sm:$0xf]
    %v799 = vld [vmem:[%s3 + $0x74] sm:$0xf]
    %v800 = vld [vmem:[%s3 + $0x78] sm:$0xf]
    %v801 = vld [vmem:[%s3 + $0x7c] sm:$0xf]
    %v802 = vld [vmem:[%s3 + $0x80] sm:$0xf]
    %v803 = vld [vmem:[%s3 + $0x84] sm:$0xf]
    %v804 = vld [vmem:[%s3 + $0x88] sm:$0x3]
    %v805 = vld [vmem:[%s4] sm:$0x1]
    %v807 = vlaneseq
    %v808 = vshrl.u32 %v807, 7
    %v809 = vsub.s32 0, %v808
    %v810 = vrot.slane %v805, %v809
    %v847 = vunpack.c.l.b16 %v770
    %v848 = vunpack.c.l.b16 %v771
    %v849 = vunpack.c.l.b16 %v772
    %v850 = vunpack.c.l.b16 %v773
    %v851 = vunpack.c.l.b16 %v774
    %v852 = vunpack.c.l.b16 %v775
    %v853 = vunpack.c.l.b16 %v776
    %v854 = vunpack.c.l.b16 %v777
    %v855 = vunpack.c.l.b16 %v778
    %v856 = vunpack.c.l.b16 %v779
    %v857 = vunpack.c.l.b16 %v780
    %v858 = vunpack.c.l.b16 %v781
    %v859 = vunpack.c.l.b16 %v782
    %v860 = vunpack.c.l.b16 %v783
    %v861 = vunpack.c.l.b16 %v784
    %v862 = vunpack.c.l.b16 %v785
    %v863 = vunpack.c.l.b16 %v786
    %v864 = vunpack.c.l.b16 %v787
    %v865 = vunpack.c.l.b16 %v788
    %v866 = vunpack.c.l.b16 %v789
    %v867 = vunpack.c.l.b16 %v790
    %v868 = vunpack.c.l.b16 %v791
    %v869 = vunpack.c.l.b16 %v792
    %v870 = vunpack.c.l.b16 %v793
    %v871 = vunpack.c.l.b16 %v794
    %v872 = vunpack.c.l.b16 %v795
    %v873 = vunpack.c.l.b16 %v796
    %v874 = vunpack.c.l.b16 %v797
    %v875 = vunpack.c.l.b16 %v798
    %v876 = vunpack.c.l.b16 %v799
    %v877 = vunpack.c.l.b16 %v800
    %v878 = vunpack.c.l.b16 %v801
    %v879 = vunpack.c.l.b16 %v802
    %v880 = vunpack.c.l.b16 %v803
    %v881 = vunpack.c.l.b16 %v804
    %v882 = vpack.c.b16 %v848, %v847
    %v883 = vpack.c.b16 %v850, %v849
    %v884 = vpack.c.b16 %v852, %v851
    %v885 = vpack.c.b16 %v854, %v853
    %v886 = vpack.c.b16 %v856, %v855
    %v887 = vpack.c.b16 %v858, %v857
    %v888 = vpack.c.b16 %v860, %v859
    %v889 = vpack.c.b16 %v862, %v861
    %v890 = vpack.c.b16 %v864, %v863
    %v891 = vpack.c.b16 %v866, %v865
    %v892 = vpack.c.b16 %v868, %v867
    %v893 = vpack.c.b16 %v870, %v869
    %v894 = vpack.c.b16 %v872, %v871
    %v895 = vpack.c.b16 %v874, %v873
    %v896 = vpack.c.b16 %v876, %v875
    %v897 = vpack.c.b16 %v878, %v877
    %v898 = vpack.c.b16 %v880, %v879
    %v899 = vpack.c.b16 %v881, %v881
    %vm917 = vcmask 154624
    %v919 = vsel %vm917, %v769, 0
    %vm921 = vcmask 1040384
    %vm922 = vcmask 1041408
    %v923 = vsel %vm921, 4294967295, 65535
    %v924 = vsel %vm922, %v923, 0
    %v926 = vand.u32 %v899, %v924
    %928 = vmatprep.subr.bf16.mxu0 0
    %929 = vmatpush1.bf16.msra.mxu0 %v882
    %930 = vmatprep.subr.bf16.mxu0 0
    %931 = vmatpush1.bf16.msra.mxu0 %v883
    %932 = vmatprep.subr.bf16.mxu0 0
    %933 = vmatpush1.bf16.msra.mxu0 %v884
    %934 = vmatprep.subr.bf16.mxu0 0
    %935 = vmatpush1.bf16.msra.mxu0 %v885
    %936 = vmatprep.subr.bf16.mxu0 0
    %937 = vmatpush1.bf16.msra.mxu0 %v886
    %938 = vmatprep.subr.bf16.mxu0 0
    %939 = vmatpush1.bf16.msra.mxu0 %v887
    %940 = vmatprep.subr.bf16.mxu0 0
    %941 = vmatpush1.bf16.msra.mxu0 %v888
    %942 = vmatprep.subr.bf16.mxu0 0
    %943 = vmatpush1.bf16.msra.mxu0 %v889
    %944 = vmatprep.subr.bf16.mxu0 0
    %945 = vmatpush1.bf16.msra.mxu0 %v890
    %946 = vmatprep.subr.bf16.mxu0 0
    %947 = vmatpush1.bf16.msra.mxu0 %v891
    %948 = vmatprep.subr.bf16.mxu0 0
    %949 = vmatpush1.bf16.msra.mxu0 %v892
    %950 = vmatprep.subr.bf16.mxu0 0
    %951 = vmatpush1.bf16.msra.mxu0 %v893
    %952 = vmatprep.subr.bf16.mxu0 0
    %953 = vmatpush1.bf16.msra.mxu0 %v894
    %954 = vmatprep.subr.bf16.mxu0 0
    %955 = vmatpush1.bf16.msra.mxu0 %v895
    %956 = vmatprep.subr.bf16.mxu0 0
    %957 = vmatpush1.bf16.msra.mxu0 %v896
    %958 = vmatprep.subr.bf16.mxu0 0
    %959 = vmatpush1.bf16.msra.mxu0 %v897
    %960 = vmatprep.mubr.bf16.mxu0 %v768
    %961 = vmatmul.mubr.bf16.gmra.mrb[0].mxu0 %v767
    %v962 = vpop.f32.mrb[0].mxu0
    %v963 = vadd.f32 %v810, %v962
    %v964 = vpop.f32.mrb[0].mxu0
    %v965 = vpop.f32.mrb[0].mxu0
    %v966 = vadd.f32 %v810, %v965
    %v967 = vpop.f32.mrb[0].mxu0
    %968 = vdwg.mxu0
    %969 = vmatprep.subr.bf16.mxu0 0
    %970 = vmatpush1.bf16.msra.mxu0 %v898
    %971 = vmatprep.subr.bf16.mxu0 0
    %972 = vmatpush1.bf16.msra.mxu0 %v926
    %973 = vmatprep.subr.bf16.mxu0 0
    %974 = vmatpush1.bf16.msra.mxu0 0
    %975 = vmatprep.subr.bf16.mxu0 0
    %976 = vmatpush1.bf16.msra.mxu0 0
    %977 = vmatprep.subr.bf16.mxu0 0
    %978 = vmatpush1.bf16.msra.mxu0 0
    %979 = vmatprep.subr.bf16.mxu0 0
    %980 = vmatpush1.bf16.msra.mxu0 0
    %981 = vmatprep.subr.bf16.mxu0 0
    %982 = vmatpush1.bf16.msra.mxu0 0
    %983 = vmatprep.subr.bf16.mxu0 0
    %984 = vmatpush1.bf16.msra.mxu0 0
    %985 = vmatprep.subr.bf16.mxu0 0
    %986 = vmatpush1.bf16.msra.mxu0 0
    %987 = vmatprep.subr.bf16.mxu0 0
    %988 = vmatpush1.bf16.msra.mxu0 0
    %989 = vmatprep.subr.bf16.mxu0 0
    %990 = vmatpush1.bf16.msra.mxu0 0
    %991 = vmatprep.subr.bf16.mxu0 0
    %992 = vmatpush1.bf16.msra.mxu0 0
    %993 = vmatprep.subr.bf16.mxu0 0
    %994 = vmatpush1.bf16.msra.mxu0 0
    %995 = vmatprep.subr.bf16.mxu0 0
    %996 = vmatpush1.bf16.msra.mxu0 0
    %997 = vmatprep.subr.bf16.mxu0 0
    %998 = vmatpush1.bf16.msra.mxu0 0
    %999 = vmatprep.subr.bf16.mxu0 0
    %1000 = vmatpush1.bf16.msra.mxu0 0
    %1001 = vmatprep.mubr.bf16.mxu0 0
    %1002 = vmatmul.mubr.bf16.gmra.mrb[0].mxu0 %v919
    %v1003 = vpop.f32.mrb[0].mxu0
    %v1004 = vadd.f32 %v963, %v1003
    %v1005 = vpop.f32.mrb[0].mxu0
    %v1006 = vpop.f32.mrb[0].mxu0
    %v1007 = vadd.f32 %v966, %v1006
    %v1008 = vpop.f32.mrb[0].mxu0
    %1009 = vdwg.mxu0
    %v1010 = vmax.f32 %v1004, 0.0
    %v1011 = vmax.f32 %v1007, 0.0
    %v1012 = vmul.f32 %v1010, %v1010
    %v1014 = vrot.slane %v1010, 2
    %v1016 = vadd.f32 %v1010, %v1014
    %v1018 = vrot.slane %v1012, 2
    %v1020 = vadd.f32 %v1012, %v1018
    %v1021 = vrot.slane %v1010, 4
    %v1023 = vadd.f32 %v1016, %v1021
    %v1024 = vrot.slane %v1012, 4
    %v1026 = vadd.f32 %v1020, %v1024
    %v1027 = vrot.slane %v1010, 6
    %v1029 = vadd.f32 %v1023, %v1027
    %v1030 = vrot.slane %v1012, 6
    %v1032 = vadd.f32 %v1026, %v1030
    %v1033 = vadd.f32 %v1029, %v1011
    %v1034 = vmul.f32 %v1011, %v1011
    %v1035 = vadd.f32 %v1032, %v1034
    %v1037 = vrot.slane %v1011, 2
    %v1039 = vadd.f32 %v1033, %v1037
    %v1041 = vrot.slane %v1034, 2
    %v1043 = vadd.f32 %v1035, %v1041
    %v1044 = vrot.slane %v1011, 4
    %v1046 = vadd.f32 %v1039, %v1044
    %v1047 = vrot.slane %v1034, 4
    %v1049 = vadd.f32 %v1043, %v1047
    %v1050 = vld [vmem:[%s5] sm:$0x1]
    %v1051 = vld [vmem:[%s6] sm:$0x1]
    %vm1052 = vcmask 222208
    %v1053 = vsel %vm1052, %v1046, 0.0
    %1054 = vadd.xlane.f32.xlu0 %v1053
    %v1055 = vpop.xlane.xlu0 %1054
    %v1056 = vmul.f32 %v1055, 0.0051020407
    %v1057 = vsel %vm1052, %v1049, 0.0
    %1058 = vadd.xlane.f32.xlu0 %v1057
    %v1059 = vpop.xlane.xlu0 %1058
    %v1060 = vmul.f32 %v1059, 0.0051020407
    %v1061 = vmul.f32 %v1056, %v1056
    %v1062 = vsub.f32 %v1060, %v1061
    %v1063 = vadd.f32 %v1062, 1e-05
    %v1064 = vrsqrt.pop %v1063
    %v1066 = vlaneseq
    %v1067 = vshrl.u32 %v1066, 7
    %v1068 = vsub.s32 0, %v1067
    %v1069 = vrot.slane %v1050, %v1068
    %v1071 = vmul.f32 %v1064, %v1069
    %v1072 = vmul.f32 %v1056, %v1071
    %v1074 = vlaneseq
    %v1075 = vshrl.u32 %v1074, 7
    %v1076 = vsub.s32 0, %v1075
    %v1077 = vrot.slane %v1051, %v1076
    %v1079 = vsub.f32 %v1077, %v1072
    %1081 = vrot.lane.b32.xlu0 %v1046, 100
    %v1082 = vpop.permute.xlu0 %1081
    %v1084 = vsel %vm1052, %v1082, 0.0
    %1085 = vadd.xlane.f32.xlu0 %v1084
    %v1086 = vpop.xlane.xlu0 %1085
    %v1087 = vmul.f32 %v1086, 0.0051020407
    %1089 = vrot.lane.b32.xlu0 %v1049, 100
    %v1090 = vpop.permute.xlu0 %1089
    %v1092 = vsel %vm1052, %v1090, 0.0
    %1093 = vadd.xlane.f32.xlu0 %v1092
    %v1094 = vpop.xlane.xlu0 %1093
    %v1095 = vmul.f32 %v1094, 0.0051020407
    %v1096 = vmul.f32 %v1087, %v1087
    %v1097 = vsub.f32 %v1095, %v1096
    %v1098 = vadd.f32 %v1097, 1e-05
    %v1099 = vrsqrt.pop %v1098
    %v1100 = vmul.f32 %v1099, %v1069
    %v1101 = vmul.f32 %v1087, %v1100
    %v1102 = vsub.f32 %v1077, %v1101
    %1103 = vrot.lane.b32.xlu0 %v1046, 72
    %v1104 = vpop.permute.xlu0 %1103
    %v1106 = vsel %vm1052, %v1104, 0.0
    %1107 = vadd.xlane.f32.xlu0 %v1106
    %v1108 = vpop.xlane.xlu0 %1107
    %v1109 = vmul.f32 %v1108, 0.0051020407
    %1110 = vrot.lane.b32.xlu0 %v1049, 72
    %v1111 = vpop.permute.xlu0 %1110
    %v1113 = vsel %vm1052, %v1111, 0.0
    %1114 = vadd.xlane.f32.xlu0 %v1113
    %v1115 = vpop.xlane.xlu0 %1114
    %v1116 = vmul.f32 %v1115, 0.0051020407
    %v1117 = vmul.f32 %v1109, %v1109
    %v1118 = vsub.f32 %v1116, %v1117
    %v1119 = vadd.f32 %v1118, 1e-05
    %v1120 = vrsqrt.pop %v1119
    %v1121 = vmul.f32 %v1120, %v1069
    %v1122 = vmul.f32 %v1109, %v1121
    %v1123 = vsub.f32 %v1077, %v1122
    %vm1124 = vcmask 228352
    %v1125 = vsel %vm1124, %v1071, %v1100
    %vm1126 = vcmask 457728
    %v1127 = vsel %vm1126, %v1125, %v1121
    %v1128 = vsel %vm1124, %v1079, %v1102
    %v1129 = vsel %vm1126, %v1128, %v1123
    %v1130 = vmul.f32 %v1010, %v1127
    %v1131 = vadd.f32 %v1130, %v1129
    %v1133 = vrot.slane %v1127, 6
    %v1135 = vmul.f32 %v1010, %v1133
    %v1137 = vrot.slane %v1129, 6
    %v1139 = vadd.f32 %v1135, %v1137
    %v1140 = vrot.slane %v1127, 4
    %v1142 = vmul.f32 %v1010, %v1140
    %v1143 = vrot.slane %v1129, 4
    %v1145 = vadd.f32 %v1142, %v1143
    %v1146 = vrot.slane %v1127, 2
    %v1148 = vmul.f32 %v1010, %v1146
    %v1149 = vrot.slane %v1129, 2
    %v1151 = vadd.f32 %v1148, %v1149
    %v1152 = vmul.f32 %v1011, %v1127
    %v1153 = vadd.f32 %v1152, %v1129
    %v1154 = vmul.f32 %v1011, %v1133
    %v1155 = vadd.f32 %v1154, %v1137
    %v1156 = vmul.f32 %v1011, %v1140
    %v1157 = vadd.f32 %v1156, %v1143
    %v1159 = vrot.slane %v1139, 2
    %1160 = vrot.lane.b32.xlu0 %v1159, 84
    %v1161 = vpop.permute.xlu0 %1160
    %v1164 = vrot.slane %v1145, 4
    %1165 = vrot.lane.b32.xlu0 %v1164, 40
    %v1166 = vpop.permute.xlu0 %1165
    %v1169 = vrot.slane %v1151, 6
    %1170 = vrot.lane.b32.xlu0 %v1169, 124
    %v1171 = vpop.permute.xlu0 %1170
    %1174 = vrot.lane.b32.xlu0 %v1153, 80
    %v1175 = vpop.permute.xlu0 %1174
    %v1178 = vrot.slane %v1155, 2
    %1179 = vrot.lane.b32.xlu0 %v1178, 36
    %v1180 = vpop.permute.xlu0 %1179
    %v1183 = vrot.slane %v1157, 4
    %1184 = vrot.lane.b32.xlu0 %v1183, 120
    %v1185 = vpop.permute.xlu0 %1184
    %vm1187 = vcmask 687104
    %v1188 = vsel %vm1187, %v1131, %v1161
    %vm1189 = vcmask 326656
    %v1190 = vsel %vm1189, %v1161, %v1166
    %vm1191 = vcmask 1014784
    %v1192 = vsel %vm1191, %v1190, %v1171
    %vm1193 = vcmask 654336
    %v1194 = vsel %vm1193, %v1171, %v1175
    %vm1195 = vcmask 293888
    %v1196 = vsel %vm1195, %v1175, %v1180
    %vm1197 = vcmask 982016
    %v1198 = vsel %vm1197, %v1196, %v1185
    %v1199 = vpack.c.bf16 %v1188, %v1188
    %v1200 = vpack.c.bf16 %v1192, %v1192
    %v1201 = vpack.c.bf16 %v1194, %v1194
    %v1202 = vpack.c.bf16 %v1198, %v1198
    %v1203 = vpack.c.bf16 %v1185, %v1185
    %v1204 = vld [vmem:[%s7] sm:$0xf]
    %v1205 = vld [vmem:[%s7 + $0x4] sm:$0xf]
    %v1206 = vld [vmem:[%s7 + $0x8] sm:$0xf]
    %v1207 = vld [vmem:[%s7 + $0xc] sm:$0xf]
    %v1208 = vld [vmem:[%s7 + $0x10] sm:$0xf]
    %v1209 = vld [vmem:[%s7 + $0x14] sm:$0xf]
    %v1210 = vld [vmem:[%s7 + $0x18] sm:$0xf]
    %v1211 = vld [vmem:[%s7 + $0x1c] sm:$0xf]
    %v1212 = vld [vmem:[%s7 + $0x20] sm:$0xf]
    %v1213 = vld [vmem:[%s7 + $0x24] sm:$0xf]
    %v1214 = vld [vmem:[%s7 + $0x28] sm:$0xf]
    %v1215 = vld [vmem:[%s7 + $0x2c] sm:$0xf]
    %v1216 = vld [vmem:[%s7 + $0x30] sm:$0xf]
    %v1217 = vld [vmem:[%s7 + $0x34] sm:$0xf]
    %v1218 = vld [vmem:[%s7 + $0x38] sm:$0xf]
    %v1219 = vld [vmem:[%s7 + $0x3c] sm:$0xf]
    %v1220 = vld [vmem:[%s7 + $0x40] sm:$0xf]
    %v1221 = vld [vmem:[%s7 + $0x44] sm:$0xf]
    %v1222 = vld [vmem:[%s7 + $0x48] sm:$0xf]
    %v1223 = vld [vmem:[%s7 + $0x4c] sm:$0xf]
    %v1224 = vld [vmem:[%s7 + $0x50] sm:$0xf]
    %v1225 = vld [vmem:[%s7 + $0x54] sm:$0xf]
    %v1226 = vld [vmem:[%s7 + $0x58] sm:$0xf]
    %v1227 = vld [vmem:[%s7 + $0x5c] sm:$0xf]
    %v1228 = vld [vmem:[%s7 + $0x60] sm:$0xf]
    %v1229 = vld [vmem:[%s7 + $0x64] sm:$0xf]
    %v1230 = vld [vmem:[%s7 + $0x68] sm:$0xf]
    %v1231 = vld [vmem:[%s7 + $0x6c] sm:$0xf]
    %v1232 = vld [vmem:[%s7 + $0x70] sm:$0xf]
    %v1233 = vld [vmem:[%s7 + $0x74] sm:$0xf]
    %v1234 = vld [vmem:[%s7 + $0x78] sm:$0xf]
    %v1235 = vld [vmem:[%s7 + $0x7c] sm:$0xf]
    %v1236 = vld [vmem:[%s7 + $0x80] sm:$0xf]
    %v1237 = vld [vmem:[%s7 + $0x84] sm:$0xf]
    %v1238 = vld [vmem:[%s7 + $0x88] sm:$0xf]
    %v1239 = vld [vmem:[%s7 + $0x8c] sm:$0xf]
    %v1240 = vld [vmem:[%s7 + $0x90] sm:$0xf]
    %v1241 = vld [vmem:[%s7 + $0x94] sm:$0xf]
    %v1242 = vld [vmem:[%s7 + $0x98] sm:$0xf]
    %v1243 = vld [vmem:[%s7 + $0x9c] sm:$0xf]
    %v1244 = vld [vmem:[%s7 + $0xa0] sm:$0xf]
    %v1245 = vld [vmem:[%s7 + $0xa4] sm:$0xf]
    %v1246 = vld [vmem:[%s7 + $0xa8] sm:$0xf]
    %v1247 = vld [vmem:[%s7 + $0xac] sm:$0xf]
    %v1248 = vld [vmem:[%s7 + $0xb0] sm:$0xf]
    %v1249 = vld [vmem:[%s7 + $0xb4] sm:$0xf]
    %v1250 = vld [vmem:[%s7 + $0xb8] sm:$0xf]
    %v1251 = vld [vmem:[%s7 + $0xbc] sm:$0xf]
    %v1252 = vld [vmem:[%s7 + $0xc0] sm:$0xf]
    %v1253 = vld [vmem:[%s7 + $0xc4] sm:$0xf]
    %v1254 = vld [vmem:[%s7 + $0xc8] sm:$0xf]
    %v1255 = vld [vmem:[%s7 + $0xcc] sm:$0xf]
    %v1256 = vld [vmem:[%s7 + $0xd0] sm:$0xf]
    %v1257 = vld [vmem:[%s7 + $0xd4] sm:$0xf]
    %v1258 = vld [vmem:[%s7 + $0xd8] sm:$0xf]
    %v1259 = vld [vmem:[%s7 + $0xdc] sm:$0xf]
    %v1260 = vld [vmem:[%s7 + $0xe0] sm:$0xf]
    %v1261 = vld [vmem:[%s7 + $0xe4] sm:$0xf]
    %v1262 = vld [vmem:[%s7 + $0xe8] sm:$0xf]
    %v1263 = vld [vmem:[%s7 + $0xec] sm:$0xf]
    %v1264 = vld [vmem:[%s7 + $0xf0] sm:$0xf]
    %v1265 = vld [vmem:[%s7 + $0xf4] sm:$0xf]
    %v1266 = vld [vmem:[%s7 + $0xf8] sm:$0xf]
    %v1267 = vld [vmem:[%s7 + $0xfc] sm:$0xf]
    %v1268 = vld [vmem:[%s7 + $0x100] sm:$0xf]
    %v1269 = vld [vmem:[%s7 + $0x104] sm:$0xf]
    %v1270 = vld [vmem:[%s7 + $0x108] sm:$0xf]
    %v1271 = vld [vmem:[%s7 + $0x10c] sm:$0xf]
    %v1272 = vld [vmem:[%s7 + $0x110] sm:$0xf]
    %v1273 = vld [vmem:[%s7 + $0x114] sm:$0xf]
    %v1274 = vld [vmem:[%s7 + $0x118] sm:$0xf]
    %v1275 = vld [vmem:[%s7 + $0x11c] sm:$0xf]
    %v1276 = vld [vmem:[%s7 + $0x120] sm:$0xf]
    %v1277 = vld [vmem:[%s7 + $0x124] sm:$0x3]
    %v1278 = vld [vmem:[%s8] sm:$0x1]
    %v1280 = vlaneseq
    %v1281 = vshrl.u32 %v1280, 7
    %v1282 = vsub.s32 0, %v1281
    %v1283 = vrot.slane %v1278, %v1282
    %v1359 = vunpack.c.l.b16 %v1204
    %v1360 = vunpack.c.l.b16 %v1205
    %v1361 = vunpack.c.l.b16 %v1206
    %v1362 = vunpack.c.l.b16 %v1207
    %v1363 = vunpack.c.l.b16 %v1208
    %v1364 = vunpack.c.l.b16 %v1209
    %v1365 = vunpack.c.l.b16 %v1210
    %v1366 = vunpack.c.l.b16 %v1211
    %v1367 = vunpack.c.l.b16 %v1212
    %v1368 = vunpack.c.l.b16 %v1213
    %v1369 = vunpack.c.l.b16 %v1214
    %v1370 = vunpack.c.l.b16 %v1215
    %v1371 = vunpack.c.l.b16 %v1216
    %v1372 = vunpack.c.l.b16 %v1217
    %v1373 = vunpack.c.l.b16 %v1218
    %v1374 = vunpack.c.l.b16 %v1219
    %v1375 = vunpack.c.l.b16 %v1220
    %v1376 = vunpack.c.l.b16 %v1221
    %v1377 = vunpack.c.l.b16 %v1222
    %v1378 = vunpack.c.l.b16 %v1223
    %v1379 = vunpack.c.l.b16 %v1224
    %v1380 = vunpack.c.l.b16 %v1225
    %v1381 = vunpack.c.l.b16 %v1226
    %v1382 = vunpack.c.l.b16 %v1227
    %v1383 = vunpack.c.l.b16 %v1228
    %v1384 = vunpack.c.l.b16 %v1229
    %v1385 = vunpack.c.l.b16 %v1230
    %v1386 = vunpack.c.l.b16 %v1231
    %v1387 = vunpack.c.l.b16 %v1232
    %v1388 = vunpack.c.l.b16 %v1233
    %v1389 = vunpack.c.l.b16 %v1234
    %v1390 = vunpack.c.l.b16 %v1235
    %v1391 = vunpack.c.l.b16 %v1236
    %v1392 = vunpack.c.l.b16 %v1237
    %v1393 = vunpack.c.l.b16 %v1238
    %v1394 = vunpack.c.l.b16 %v1239
    %v1395 = vunpack.c.l.b16 %v1240
    %v1396 = vunpack.c.l.b16 %v1241
    %v1397 = vunpack.c.l.b16 %v1242
    %v1398 = vunpack.c.l.b16 %v1243
    %v1399 = vunpack.c.l.b16 %v1244
    %v1400 = vunpack.c.l.b16 %v1245
    %v1401 = vunpack.c.l.b16 %v1246
    %v1402 = vunpack.c.l.b16 %v1247
    %v1403 = vunpack.c.l.b16 %v1248
    %v1404 = vunpack.c.l.b16 %v1249
    %v1405 = vunpack.c.l.b16 %v1250
    %v1406 = vunpack.c.l.b16 %v1251
    %v1407 = vunpack.c.l.b16 %v1252
    %v1408 = vunpack.c.l.b16 %v1253
    %v1409 = vunpack.c.l.b16 %v1254
    %v1410 = vunpack.c.l.b16 %v1255
    %v1411 = vunpack.c.l.b16 %v1256
    %v1412 = vunpack.c.l.b16 %v1257
    %v1413 = vunpack.c.l.b16 %v1258
    %v1414 = vunpack.c.l.b16 %v1259
    %v1415 = vunpack.c.l.b16 %v1260
    %v1416 = vunpack.c.l.b16 %v1261
    %v1417 = vunpack.c.l.b16 %v1262
    %v1418 = vunpack.c.l.b16 %v1263
    %v1419 = vunpack.c.l.b16 %v1264
    %v1420 = vunpack.c.l.b16 %v1265
    %v1421 = vunpack.c.l.b16 %v1266
    %v1422 = vunpack.c.l.b16 %v1267
    %v1423 = vunpack.c.l.b16 %v1268
    %v1424 = vunpack.c.l.b16 %v1269
    %v1425 = vunpack.c.l.b16 %v1270
    %v1426 = vunpack.c.l.b16 %v1271
    %v1427 = vunpack.c.l.b16 %v1272
    %v1428 = vunpack.c.l.b16 %v1273
    %v1429 = vunpack.c.l.b16 %v1274
    %v1430 = vunpack.c.l.b16 %v1275
    %v1431 = vunpack.c.l.b16 %v1276
    %v1432 = vunpack.c.l.b16 %v1277
    %v1433 = vpack.c.b16 %v1360, %v1359
    %v1434 = vpack.c.b16 %v1362, %v1361
    %v1435 = vpack.c.b16 %v1364, %v1363
    %v1436 = vpack.c.b16 %v1366, %v1365
    %v1437 = vpack.c.b16 %v1368, %v1367
    %v1438 = vpack.c.b16 %v1370, %v1369
    %v1439 = vpack.c.b16 %v1372, %v1371
    %v1440 = vpack.c.b16 %v1374, %v1373
    %v1441 = vpack.c.b16 %v1376, %v1375
    %v1442 = vpack.c.b16 %v1378, %v1377
    %v1443 = vpack.c.b16 %v1380, %v1379
    %v1444 = vpack.c.b16 %v1382, %v1381
    %v1445 = vpack.c.b16 %v1384, %v1383
    %v1446 = vpack.c.b16 %v1386, %v1385
    %v1447 = vpack.c.b16 %v1388, %v1387
    %v1448 = vpack.c.b16 %v1390, %v1389
    %v1449 = vpack.c.b16 %v1392, %v1391
    %v1450 = vpack.c.b16 %v1394, %v1393
    %v1451 = vpack.c.b16 %v1396, %v1395
    %v1452 = vpack.c.b16 %v1398, %v1397
    %v1453 = vpack.c.b16 %v1400, %v1399
    %v1454 = vpack.c.b16 %v1402, %v1401
    %v1455 = vpack.c.b16 %v1404, %v1403
    %v1456 = vpack.c.b16 %v1406, %v1405
    %v1457 = vpack.c.b16 %v1408, %v1407
    %v1458 = vpack.c.b16 %v1410, %v1409
    %v1459 = vpack.c.b16 %v1412, %v1411
    %v1460 = vpack.c.b16 %v1414, %v1413
    %v1461 = vpack.c.b16 %v1416, %v1415
    %v1462 = vpack.c.b16 %v1418, %v1417
    %v1463 = vpack.c.b16 %v1420, %v1419
    %v1464 = vpack.c.b16 %v1422, %v1421
    %v1465 = vpack.c.b16 %v1424, %v1423
    %v1466 = vpack.c.b16 %v1426, %v1425
    %v1467 = vpack.c.b16 %v1428, %v1427
    %v1468 = vpack.c.b16 %v1430, %v1429
    %v1469 = vpack.c.b16 %v1432, %v1431
    %vm1506 = vcmask 621568
    %v1508 = vsel %vm1506, %v1203, 0
    %vm1510 = vcmask 1045504
    %v1512 = vsel %vm1510, %v1469, 0
    %1514 = vmatprep.subr.bf16.mxu0 0
    %1515 = vmatpush1.bf16.msra.mxu0 %v1433
    %1516 = vmatprep.subr.bf16.mxu0 0
    %1517 = vmatpush1.bf16.msra.mxu0 %v1434
    %1518 = vmatprep.subr.bf16.mxu0 0
    %1519 = vmatpush1.bf16.msra.mxu0 %v1435
    %1520 = vmatprep.subr.bf16.mxu0 0
    %1521 = vmatpush1.bf16.msra.mxu0 %v1436
    %1522 = vmatprep.subr.bf16.mxu0 0
    %1523 = vmatpush1.bf16.msra.mxu0 %v1437
    %1524 = vmatprep.subr.bf16.mxu0 0
    %1525 = vmatpush1.bf16.msra.mxu0 %v1438
    %1526 = vmatprep.subr.bf16.mxu0 0
    %1527 = vmatpush1.bf16.msra.mxu0 %v1439
    %1528 = vmatprep.subr.bf16.mxu0 0
    %1529 = vmatpush1.bf16.msra.mxu0 %v1440
    %1530 = vmatprep.subr.bf16.mxu0 0
    %1531 = vmatpush1.bf16.msra.mxu0 %v1441
    %1532 = vmatprep.subr.bf16.mxu0 0
    %1533 = vmatpush1.bf16.msra.mxu0 %v1442
    %1534 = vmatprep.subr.bf16.mxu0 0
    %1535 = vmatpush1.bf16.msra.mxu0 %v1443
    %1536 = vmatprep.subr.bf16.mxu0 0
    %1537 = vmatpush1.bf16.msra.mxu0 %v1444
    %1538 = vmatprep.subr.bf16.mxu0 0
    %1539 = vmatpush1.bf16.msra.mxu0 %v1445
    %1540 = vmatprep.subr.bf16.mxu0 0
    %1541 = vmatpush1.bf16.msra.mxu0 %v1446
    %1542 = vmatprep.subr.bf16.mxu0 0
    %1543 = vmatpush1.bf16.msra.mxu0 %v1447
    %1544 = vmatprep.subr.bf16.mxu0 0
    %1545 = vmatpush1.bf16.msra.mxu0 %v1448
    %1546 = vmatprep.mubr.bf16.mxu0 %v1200
    %1547 = vmatmul.mubr.bf16.gmra.mrb[0].mxu0 %v1199
    %v1548 = vpop.f32.mrb[0].mxu0
    %v1549 = vadd.f32 %v1283, %v1548
    %v1550 = vpop.f32.mrb[0].mxu0
    %v1551 = vpop.f32.mrb[0].mxu0
    %v1552 = vpop.f32.mrb[0].mxu0
    %1553 = vdwg.mxu0
    %1554 = vmatprep.subr.bf16.mxu0 0
    %1555 = vmatpush1.bf16.msra.mxu0 %v1449
    %1556 = vmatprep.subr.bf16.mxu0 0
    %1557 = vmatpush1.bf16.msra.mxu0 %v1450
    %1558 = vmatprep.subr.bf16.mxu0 0
    %1559 = vmatpush1.bf16.msra.mxu0 %v1451
    %1560 = vmatprep.subr.bf16.mxu0 0
    %1561 = vmatpush1.bf16.msra.mxu0 %v1452
    %1562 = vmatprep.subr.bf16.mxu0 0
    %1563 = vmatpush1.bf16.msra.mxu0 %v1453
    %1564 = vmatprep.subr.bf16.mxu0 0
    %1565 = vmatpush1.bf16.msra.mxu0 %v1454
    %1566 = vmatprep.subr.bf16.mxu0 0
    %1567 = vmatpush1.bf16.msra.mxu0 %v1455
    %1568 = vmatprep.subr.bf16.mxu0 0
    %1569 = vmatpush1.bf16.msra.mxu0 %v1456
    %1570 = vmatprep.subr.bf16.mxu0 0
    %1571 = vmatpush1.bf16.msra.mxu0 %v1457
    %1572 = vmatprep.subr.bf16.mxu0 0
    %1573 = vmatpush1.bf16.msra.mxu0 %v1458
    %1574 = vmatprep.subr.bf16.mxu0 0
    %1575 = vmatpush1.bf16.msra.mxu0 %v1459
    %1576 = vmatprep.subr.bf16.mxu0 0
    %1577 = vmatpush1.bf16.msra.mxu0 %v1460
    %1578 = vmatprep.subr.bf16.mxu0 0
    %1579 = vmatpush1.bf16.msra.mxu0 %v1461
    %1580 = vmatprep.subr.bf16.mxu0 0
    %1581 = vmatpush1.bf16.msra.mxu0 %v1462
    %1582 = vmatprep.subr.bf16.mxu0 0
    %1583 = vmatpush1.bf16.msra.mxu0 %v1463
    %1584 = vmatprep.subr.bf16.mxu0 0
    %1585 = vmatpush1.bf16.msra.mxu0 %v1464
    %1586 = vmatprep.mubr.bf16.mxu0 %v1202
    %1587 = vmatmul.mubr.bf16.gmra.mrb[0].mxu0 %v1201
    %v1588 = vpop.f32.mrb[0].mxu0
    %v1589 = vadd.f32 %v1549, %v1588
    %v1590 = vpop.f32.mrb[0].mxu0
    %v1591 = vpop.f32.mrb[0].mxu0
    %v1592 = vpop.f32.mrb[0].mxu0
    %1593 = vdwg.mxu0
    %1594 = vmatprep.subr.bf16.mxu0 0
    %1595 = vmatpush1.bf16.msra.mxu0 %v1465
    %1596 = vmatprep.subr.bf16.mxu0 0
    %1597 = vmatpush1.bf16.msra.mxu0 %v1466
    %1598 = vmatprep.subr.bf16.mxu0 0
    %1599 = vmatpush1.bf16.msra.mxu0 %v1467
    %1600 = vmatprep.subr.bf16.mxu0 0
    %1601 = vmatpush1.bf16.msra.mxu0 %v1468
    %1602 = vmatprep.subr.bf16.mxu0 0
    %1603 = vmatpush1.bf16.msra.mxu0 %v1512
    %1604 = vmatprep.subr.bf16.mxu0 0
    %1605 = vmatpush1.bf16.msra.mxu0 0
    %1606 = vmatprep.subr.bf16.mxu0 0
    %1607 = vmatpush1.bf16.msra.mxu0 0
    %1608 = vmatprep.subr.bf16.mxu0 0
    %1609 = vmatpush1.bf16.msra.mxu0 0
    %1610 = vmatprep.subr.bf16.mxu0 0
    %1611 = vmatpush1.bf16.msra.mxu0 0
    %1612 = vmatprep.subr.bf16.mxu0 0
    %1613 = vmatpush1.bf16.msra.mxu0 0
    %1614 = vmatprep.subr.bf16.mxu0 0
    %1615 = vmatpush1.bf16.msra.mxu0 0
    %1616 = vmatprep.subr.bf16.mxu0 0
    %1617 = vmatpush1.bf16.msra.mxu0 0
    %1618 = vmatprep.subr.bf16.mxu0 0
    %1619 = vmatpush1.bf16.msra.mxu0 0
    %1620 = vmatprep.subr.bf16.mxu0 0
    %1621 = vmatpush1.bf16.msra.mxu0 0
    %1622 = vmatprep.subr.bf16.mxu0 0
    %1623 = vmatpush1.bf16.msra.mxu0 0
    %1624 = vmatprep.subr.bf16.mxu0 0
    %1625 = vmatpush1.bf16.msra.mxu0 0
    %1626 = vmatprep.mubr.bf16.mxu0 0
    %1627 = vmatmul.mubr.bf16.gmra.mrb[0].mxu0 %v1508
    %v1628 = vpop.f32.mrb[0].mxu0
    %v1629 = vadd.f32 %v1589, %v1628
    %v1630 = vpop.f32.mrb[0].mxu0
    %v1631 = vpop.f32.mrb[0].mxu0
    %v1632 = vpop.f32.mrb[0].mxu0
    %1633 = vdwg.mxu0
    %v1634 = vmax.f32 %v1629, 0.0
    %v1635 = vpack.c.bf16 %v1634, %v1634
    %v1636 = vld [vmem:[%s9] sm:$0xf]
    %v1637 = vld [vmem:[%s9 + $0x4] sm:$0xf]
    %v1638 = vld [vmem:[%s9 + $0x8] sm:$0xf]
    %v1639 = vld [vmem:[%s9 + $0xc] sm:$0xf]
    %v1640 = vld [vmem:[%s9 + $0x10] sm:$0xf]
    %v1641 = vld [vmem:[%s9 + $0x14] sm:$0xf]
    %v1642 = vld [vmem:[%s9 + $0x18] sm:$0xf]
    %v1643 = vld [vmem:[%s9 + $0x1c] sm:$0xf]
    %v1644 = vld [vmem:[%s9 + $0x20] sm:$0xf]
    %v1645 = vld [vmem:[%s9 + $0x24] sm:$0xf]
    %v1646 = vld [vmem:[%s9 + $0x28] sm:$0xf]
    %v1647 = vld [vmem:[%s9 + $0x2c] sm:$0xf]
    %v1648 = vld [vmem:[%s9 + $0x30] sm:$0x3]
    %v1649 = vld [vmem:[%s10] sm:$0x1]
    %v1651 = vlaneseq
    %v1652 = vshrl.u32 %v1651, 7
    %v1653 = vsub.s32 0, %v1652
    %v1654 = vrot.slane %v1649, %v1653
    %v1669 = vunpack.c.l.b16 %v1636
    %v1670 = vunpack.c.l.b16 %v1637
    %v1671 = vunpack.c.l.b16 %v1638
    %v1672 = vunpack.c.l.b16 %v1639
    %v1673 = vunpack.c.l.b16 %v1640
    %v1674 = vunpack.c.l.b16 %v1641
    %v1675 = vunpack.c.l.b16 %v1642
    %v1676 = vunpack.c.l.b16 %v1643
    %v1677 = vunpack.c.l.b16 %v1644
    %v1678 = vunpack.c.l.b16 %v1645
    %v1679 = vunpack.c.l.b16 %v1646
    %v1680 = vunpack.c.l.b16 %v1647
    %v1681 = vunpack.c.l.b16 %v1648
    %v1682 = vpack.c.b16 %v1670, %v1669
    %v1683 = vpack.c.b16 %v1672, %v1671
    %v1684 = vpack.c.b16 %v1674, %v1673
    %v1685 = vpack.c.b16 %v1676, %v1675
    %v1686 = vpack.c.b16 %v1678, %v1677
    %v1687 = vpack.c.b16 %v1680, %v1679
    %v1688 = vpack.c.b16 %v1681, %v1681
    %vm1695 = vcmask 818176
    %v1697 = vsel %vm1695, %v1635, 0
    %v1700 = vsel %vm922, %v1688, 0
    %1702 = vmatprep.subr.bf16.mxu0 0
    %1703 = vmatpush1.bf16.msra.mxu0 %v1682
    %1704 = vmatprep.subr.bf16.mxu0 0
    %1705 = vmatpush1.bf16.msra.mxu0 %v1683
    %1706 = vmatprep.subr.bf16.mxu0 0
    %1707 = vmatpush1.bf16.msra.mxu0 %v1684
    %1708 = vmatprep.subr.bf16.mxu0 0
    %1709 = vmatpush1.bf16.msra.mxu0 %v1685
    %1710 = vmatprep.subr.bf16.mxu0 0
    %1711 = vmatpush1.bf16.msra.mxu0 %v1686
    %1712 = vmatprep.subr.bf16.mxu0 0
    %1713 = vmatpush1.bf16.msra.mxu0 %v1687
    %1714 = vmatprep.subr.bf16.mxu0 0
    %1715 = vmatpush1.bf16.msra.mxu0 %v1700
    %1716 = vmatprep.subr.bf16.mxu0 0
    %1717 = vmatpush1.bf16.msra.mxu0 0
    %1718 = vmatprep.subr.bf16.mxu0 0
    %1719 = vmatpush1.bf16.msra.mxu0 0
    %1720 = vmatprep.subr.bf16.mxu0 0
    %1721 = vmatpush1.bf16.msra.mxu0 0
    %1722 = vmatprep.subr.bf16.mxu0 0
    %1723 = vmatpush1.bf16.msra.mxu0 0
    %1724 = vmatprep.subr.bf16.mxu0 0
    %1725 = vmatpush1.bf16.msra.mxu0 0
    %1726 = vmatprep.subr.bf16.mxu0 0
    %1727 = vmatpush1.bf16.msra.mxu0 0
    %1728 = vmatprep.subr.bf16.mxu0 0
    %1729 = vmatpush1.bf16.msra.mxu0 0
    %1730 = vmatprep.subr.bf16.mxu0 0
    %1731 = vmatpush1.bf16.msra.mxu0 0
    %1732 = vmatprep.subr.bf16.mxu0 0
    %1733 = vmatpush1.bf16.msra.mxu0 0
    %1734 = vmatprep.mubr.bf16.mxu0 0
    %1735 = vmatmul.mubr.bf16.gmra.mrb[0].mxu0 %v1697
    %v1736 = vpop.f32.mrb[0].mxu0
    %v1737 = vadd.f32 %v1654, %v1736
    %v1738 = vpop.f32.mrb[0].mxu0
    %v1739 = vpop.f32.mrb[0].mxu0
    %v1740 = vpop.f32.mrb[0].mxu0
    %1741 = vdwg.mxu0
    %vm1742 = vcmask 74752
    %v1743 = vsel %vm1742, %v1737, -inf
    %v1744 = vrot.slane %v1743, 4
    %v1745 = vmax.f32 %v1743, %v1744
    %v1746 = vrot.slane %v1745, 2
    %v1747 = vmax.f32 %v1745, %v1746
    %v1748 = vrot.slane %v1747, 1
    %v1749 = vmax.f32 %v1747, %v1748
    %v1750 = vsub.f32 %v1737, %v1749
    %v1751 = vmul.f32 %v1750, 1.442695
    %v1752 = vpow.pop %v1751
    %v1753 = vsel %vm1742, %v1752, 0.0
    %v1754 = vrot.slane %v1753, 4
    %v1755 = vadd.f32 %v1753, %v1754
    %v1756 = vrot.slane %v1755, 2
    %v1757 = vadd.f32 %v1755, %v1756
    %v1758 = vrot.slane %v1757, 1
    %v1759 = vadd.f32 %v1757, %v1758
    %v1760 = vlog2.pop %v1759
    %v1761 = vmul.f32 %v1760, 0.6931472
    %v1762 = vadd.f32 %v1749, %v1761
    %v1763 = vsub.f32 %v1737, %v1762
    %1764 = vst.msk [vmem:[#allocation2] sm:$0x3] %vm1742, %v1763
    // Predicated region
    $region46: #{classification_model_forward.1} parent=1 // pred_check
      _
    $region47: #{classification_model_forward.1} parent=1 // pred_check_branch
      %1766 = sbr.rel (0) target = $region49
    $region48: #{classification_model_forward.1} parent=1 // pred_region
      %s1768 = ssub.s32 32, 32
      %1769 = vsyncadd [#allocation3], %s1768
      %s1771 = sshll.u32 [#allocation2], 4
      %s1772 = int_to_ptr.vmem [resolvable:$true] %s1771
      %1774 = dma.vmem_to_hbm [thread:$0]  %s1772, 32, %s11, [#allocation3]
    $region49: #{classification_model_forward.1} parent=1 // pred_fallthru
      _
    // Predicated region
    $region50: #{classification_model_forward.1} parent=1 // pred_check
      _
    $region51: #{classification_model_forward.1} parent=1 // pred_check_branch
      %1776 = sbr.rel (0) target = $region53
    $region52: #{classification_model_forward.1} parent=1 // pred_region
      %1777 = dma.done [#allocation3], 32
    $region53: #{classification_model_forward.1} parent=1 // pred_fallthru
      _
    %1778 = vsyncpa [#allocation3], 1

</llo_original>
